<compile_context>
chip_gen: v7x
topology: tpu7x:2x2x1
jax: 0.10.0
libtpu: 0.0.40
codegen_flags: <defaults>
</compile_context>

<pallas_src>
import numpy as np
from typing import NamedTuple, Optional

import jax
import jax.numpy as jnp
from jax.experimental import pallas as pl
from jax.experimental.pallas import tpu as pltpu


def _round_up(n: int, m: int) -> int:
    return ((n + m - 1) // m) * m


def _vmem_budget_bytes() -> int:
    """VMEM limit handed to Mosaic: ~78% of physical capacity
    (~100 MiB on 128 MiB v5e/v6e, ~50 MiB on 64 MiB-per-core v7x)."""
    cap = 64 * 1024 * 1024  # conservative default if query fails
    try:
        info = pltpu.get_tpu_info()
        cap = int(getattr(info, "vmem_capacity_bytes", cap))
    except Exception:
        pass
    return (cap * 25) // 32


class FFNParams(NamedTuple):
    w1: jax.Array   # (dmp, dfp) bf16, lane-padded
    b1: jax.Array   # (1, dfp)   f32
    w2: jax.Array   # (dfp, dmp) bf16
    b2: jax.Array   # (1, dmp)   f32
    d_model: int
    d_ff: int


def prepare_ffn_params(w1, b1, w2, b2, *, lane_multiple: int = 128) -> FFNParams:
    """One-time weight prep: bf16 cast + zero-pad lane dims to `lane_multiple`
    (128 floor; 256 fills the v6e/v7x MXU for odd dims). Call once and reuse so the
    per-call path is free of weight casts/copies in HBM.
    Zero padding is exact for this block: ReLU(0 + 0) = 0 and padded w2 rows are
    zero, so padded d_ff columns contribute nothing (would NOT hold for an
    activation with f(0) != 0 applied after a padded bias)."""
    d_model, d_ff = w1.shape
    dmp = _round_up(d_model, lane_multiple)
    dfp = _round_up(d_ff, lane_multiple)
    w1b = jnp.asarray(w1, jnp.bfloat16)
    w2b = jnp.asarray(w2, jnp.bfloat16)
    b1f = jnp.asarray(b1, jnp.float32).reshape(1, d_ff)
    b2f = jnp.asarray(b2, jnp.float32).reshape(1, d_model)
    if dmp != d_model or dfp != d_ff:   # skip pad copies when already lane-aligned
        w1b = jnp.zeros((dmp, dfp), jnp.bfloat16).at[:d_model, :d_ff].set(w1b)
        w2b = jnp.zeros((dfp, dmp), jnp.bfloat16).at[:d_ff, :d_model].set(w2b)
        b1f = jnp.zeros((1, dfp), jnp.float32).at[:, :d_ff].set(b1f)
        b2f = jnp.zeros((1, dmp), jnp.float32).at[:, :d_model].set(b2f)
    return FFNParams(w1b, b1f, w2b, b2f, d_model, d_ff)


def _ffn_resident_kernel(x_ref, w1_ref, b1_ref, w2_ref, b2_ref, o_ref):
    # x_ref: (TM, dmp) f32; w1: (dmp, dfp) bf16; w2: (dfp, dmp) bf16; biases f32.
    x = x_ref[...].astype(jnp.bfloat16)            # cast in-kernel (hidden under MXU)
    h = jnp.dot(x, w1_ref[...], preferred_element_type=jnp.float32)
    h = jnp.maximum(h + b1_ref[...], 0.0)          # bias + ReLU in f32 on the VPU
    # TODO(synk): dropout is identity (eval mode); training-mode masking via
    # pltpu.prng_seed/prng_random_bits is not implemented.
    y = jnp.dot(h.astype(jnp.bfloat16), w2_ref[...],
                preferred_element_type=jnp.float32)
    o_ref[...] = (y + b2_ref[...]).astype(o_ref.dtype)


def _ffn_streamed_kernel(x_ref, w1_ref, b1_ref, w2_ref, b2_ref, o_ref, acc_ref):
    # Streams d_ff in chunks of TF; acc_ref is an f32 (TM, dmp) accumulator.
    k = pl.program_id(1)

    @pl.when(k == 0)
    def _():
        acc_ref[...] = jnp.zeros_like(acc_ref)

    x = x_ref[...].astype(jnp.bfloat16)
    h = jnp.dot(x, w1_ref[...], preferred_element_type=jnp.float32)
    h = jnp.maximum(h + b1_ref[...], 0.0)          # per-chunk bias + ReLU (elementwise over d_ff)
    acc_ref[...] += jnp.dot(h.astype(jnp.bfloat16), w2_ref[...],
                            preferred_element_type=jnp.float32)

    @pl.when(k == pl.num_programs(1) - 1)
    def _():
        o_ref[...] = (acc_ref[...] + b2_ref[...]).astype(o_ref.dtype)


def feed_forward_block(x, params: FFNParams, *, tm: Optional[int] = None,
                       tf: Optional[int] = None, out_dtype=None,
                       force_streamed: bool = False):
    """x: (batch, seq, d_model). params: prepare_ffn_params(...) output.
    Matches the PyTorch FeedForwardBlock forward in eval mode (dropout = identity)."""
    batch, seq, d_model = x.shape
    assert d_model == params.d_model, "x feature dim does not match params"
    dmp, dfp = params.w1.shape
    M = batch * seq
    out_dtype = x.dtype if out_dtype is None else out_dtype
    x_bytes = np.dtype(x.dtype).itemsize
    out_bytes = np.dtype(out_dtype).itemsize

    budget = _vmem_budget_bytes()
    slack = 2 * 1024 * 1024

    # --- VMEM cost models (bytes) ---
    # resident: bf16 w1+w2 single-buffered + biases; per-row: x(dbl) + out(dbl)
    # + f32 h + bf16 temps.
    resident_fixed = 2 * dmp * dfp * 2 + (dmp + dfp) * 4
    resident_row = dmp * x_bytes * 2 + dmp * out_bytes * 2 + dfp * 4 + dmp * 2 + dfp * 2

    def pick_tm(row_bytes, fixed_bytes):
        if tm is not None:
            t = tm
        else:
            t = 128
            for cand in (1024, 512, 256, 128):
                if fixed_bytes + cand * row_bytes + slack <= budget:
                    t = cand
                    break
        return max(8, min(t, _round_up(M, 8)))

    def pad_x(TM):
        Mp = _round_up(M, TM)
        x2d = x.reshape(M, d_model)
        if Mp != M or dmp != d_model:
            return jnp.zeros((Mp, dmp), x.dtype).at[:M, :d_model].set(x2d), Mp
        return x2d, Mp

    def finish(out_p):
        return out_p[:M, :d_model].reshape(batch, seq, d_model)

    def run_resident(single_buffer_weights: bool):
        TM = pick_tm(resident_row, resident_fixed)
        x_p, Mp = pad_x(TM)
        wmode = {"pipeline_mode": pl.Buffered(1)} if single_buffer_weights else {}
        cost = pl.CostEstimate(
            flops=4 * Mp * dmp * dfp, transcendentals=0,
            bytes_accessed=(Mp * dmp * x_bytes + 2 * dmp * dfp * 2
                            + (dmp + dfp) * 4 + Mp * dmp * out_bytes))
        out_p = pl.pallas_call(
            _ffn_resident_kernel,
            out_shape=jax.ShapeDtypeStruct((Mp, dmp), out_dtype),
            grid=(Mp // TM,),
            in_specs=[
                pl.BlockSpec((TM, dmp), lambda i: (i, 0)),            # x tile, pipelined over M
                pl.BlockSpec((dmp, dfp), lambda i: (0, 0), **wmode),  # w1 resident
                pl.BlockSpec((1, dfp), lambda i: (0, 0), **wmode),    # b1 resident
                pl.BlockSpec((dfp, dmp), lambda i: (0, 0), **wmode),  # w2 resident
                pl.BlockSpec((1, dmp), lambda i: (0, 0), **wmode),    # b2 resident
            ],
            out_specs=pl.BlockSpec((TM, dmp), lambda i: (i, 0)),
            compiler_params=pltpu.CompilerParams(
                dimension_semantics=("parallel",),     # row tiles shard on v7x's 2 TCs
                vmem_limit_bytes=budget),
            cost_estimate=cost,
        )(x_p, params.w1, params.b1, params.w2, params.b2)
        return finish(out_p)

    def run_streamed():
        if tf is not None:
            TF = tf
        else:
            TF = 512 if dfp % 512 == 0 else (256 if dfp % 256 == 0 else 128)
        assert TF % 128 == 0 and dfp % TF == 0, "tf must be a 128-multiple dividing padded d_ff"
        streamed_fixed = 2 * (dmp * TF * 2) * 2 + (TF + dmp) * 4 * 2
        streamed_row = (dmp * x_bytes * 2 + dmp * out_bytes * 2 + dmp * 4
                        + TF * 4 + TF * 2 + dmp * 2)
        TM = pick_tm(streamed_row, streamed_fixed)
        x_p, Mp = pad_x(TM)
        n_row_tiles = Mp // TM
        cost = pl.CostEstimate(
            flops=4 * Mp * dmp * dfp, transcendentals=0,
            bytes_accessed=(Mp * dmp * x_bytes + n_row_tiles * 2 * dmp * dfp * 2
                            + (dmp + dfp) * 4 + Mp * dmp * out_bytes))
        out_p = pl.pallas_call(
            _ffn_streamed_kernel,
            out_shape=jax.ShapeDtypeStruct((Mp, dmp), out_dtype),
            grid=(n_row_tiles, dfp // TF),
            in_specs=[
                pl.BlockSpec((TM, dmp), lambda i, k: (i, 0)),   # x tile (constant over k)
                pl.BlockSpec((dmp, TF), lambda i, k: (0, k)),   # w1 chunk, streamed over d_ff
                pl.BlockSpec((1, TF), lambda i, k: (0, k)),     # b1 chunk
                pl.BlockSpec((TF, dmp), lambda i, k: (k, 0)),   # w2 chunk
                pl.BlockSpec((1, dmp), lambda i, k: (0, 0)),    # b2 (tiny, constant)
            ],
            out_specs=pl.BlockSpec((TM, dmp), lambda i, k: (i, 0)),  # resident across k
            scratch_shapes=[pltpu.VMEM((TM, dmp), jnp.float32)],
            compiler_params=pltpu.CompilerParams(
                dimension_semantics=("parallel", "arbitrary"),
                vmem_limit_bytes=budget),
            cost_estimate=cost,
        )(x_p, params.w1, params.b1, params.w2, params.b2)
        return finish(out_p)

    resident_fits = resident_fixed + 128 * resident_row + slack <= budget
    if (not force_streamed) and resident_fits:
        try:
            return run_resident(True)
        except Exception:
            # pl.Buffered(1) unsupported on this jax/libtpu (or VMEM miscount):
            # retry with default double buffering, then fall back to streaming.
            try:
                return run_resident(False)
            except Exception:
                pass
    return run_streamed()


def init_params(key, d_model, d_ff):
    # Mirror PyTorch nn.Linear default init: U(-1/sqrt(fan_in), 1/sqrt(fan_in)).
    k1, k2, k3, k4 = jax.random.split(key, 4)
    bound1 = 1.0 / jnp.sqrt(d_model)
    bound2 = 1.0 / jnp.sqrt(d_ff)
    # stored as (in_features, out_features) so the kernel computes x @ W
    w1 = jax.random.uniform(k1, (d_model, d_ff), jnp.float32, -bound1, bound1)
    b1 = jax.random.uniform(k2, (1, d_ff), jnp.float32, -bound1, bound1)
    w2 = jax.random.uniform(k3, (d_ff, d_model), jnp.float32, -bound2, bound2)
    b2 = jax.random.uniform(k4, (1, d_model), jnp.float32, -bound2, bound2)
    return w1, b1, w2, b2


if __name__ == "__main__":
    batch, seq, d_model, d_ff = 2, 8, 32, 256
    key = jax.random.PRNGKey(0)
    kx, kp = jax.random.split(key)
    x = jax.random.normal(kx, (batch, seq, d_model), jnp.float32)
    w1, b1, w2, b2 = init_params(kp, d_model, d_ff)

    params = prepare_ffn_params(w1, b1, w2, b2)   # one-time weight prep (hoisted out of the call path)

    # plain f32 JAX reference (kernel uses bf16 MXU inputs -> loose tolerance)
    h_ref = jnp.maximum(x.reshape(-1, d_model) @ w1 + b1, 0.0)
    ref = (h_ref @ w2 + b2).reshape(batch, seq, d_model)

    # auto-selected path (resident weights at this size)
    out = jax.block_until_ready(feed_forward_block(x, params))
    assert out.shape == ref.shape
    assert jnp.allclose(out, ref, atol=2e-2, rtol=2e-2), "resident path mismatch vs reference"

    # explicitly exercise the d_ff-streamed accumulator path (2 chunks of 128)
    out_s = jax.block_until_ready(feed_forward_block(x, params, force_streamed=True, tf=128))
    assert jnp.allclose(out_s, ref, atol=2e-2, rtol=2e-2), "streamed path mismatch vs reference"

    print("KERNEL_OK")
</pallas_src>

<mosaic_0001>
module attributes {stable_mosaic.version = 11 : i64} {
  func.func @_ffn_resident_kernel(%arg0: i32, %arg1: memref<16x128xf32, #tpu.memory_space<vmem>>, %arg2: memref<128x256xbf16, #tpu.memory_space<vmem>>, %arg3: memref<1x256xf32, #tpu.memory_space<vmem>>, %arg4: memref<256x128xbf16, #tpu.memory_space<vmem>>, %arg5: memref<1x128xf32, #tpu.memory_space<vmem>>, %arg6: memref<16x128xf32, #tpu.memory_space<vmem>>) attributes {dimension_semantics = [#tpu.dimension_semantics<parallel>], iteration_bounds = array<i64: 1>, scalar_prefetch = 0 : i64, scratch_operands = 0 : i64, tpu.core_type = #tpu.core_type<tc>, window_params = [{transform_indices = @transform_0, window_bounds = array<i64: 16, 128>}, {pipeline_mode = #tpu.pipeline_mode<synchronous>, transform_indices = @transform_1, window_bounds = array<i64: 128, 256>}, {pipeline_mode = #tpu.pipeline_mode<synchronous>, transform_indices = @transform_2, window_bounds = array<i64: 1, 256>}, {pipeline_mode = #tpu.pipeline_mode<synchronous>, transform_indices = @transform_3, window_bounds = array<i64: 256, 128>}, {pipeline_mode = #tpu.pipeline_mode<synchronous>, transform_indices = @transform_4, window_bounds = array<i64: 1, 128>}, {transform_indices = @transform_5, window_bounds = array<i64: 16, 128>}]} {
    %c0 = arith.constant 0 : index
    %c0_0 = arith.constant 0 : index
    %0 = vector.load %arg1[%c0, %c0_0] : memref<16x128xf32, #tpu.memory_space<vmem>>, vector<16x128xf32>
    %1 = arith.truncf %0 : vector<16x128xf32> to vector<16x128xbf16>
    %c0_1 = arith.constant 0 : index
    %c0_2 = arith.constant 0 : index
    %2 = vector.load %arg2[%c0_1, %c0_2] : memref<128x256xbf16, #tpu.memory_space<vmem>>, vector<128x256xbf16>
    %cst = arith.constant dense<0.000000e+00> : vector<16x256xf32>
    %3 = tpu.matmul %1, %2, %cst {dimension_numbers = #tpu.dot_dimension_numbers<[1], [0], [0], [1], [0, 0, 1, 1], [], []>} : vector<16x128xbf16>, vector<128x256xbf16>, vector<16x256xf32> -> vector<16x256xf32>
    %c0_3 = arith.constant 0 : index
    %c0_4 = arith.constant 0 : index
    %4 = vector.load %arg3[%c0_3, %c0_4] : memref<1x256xf32, #tpu.memory_space<vmem>>, vector<1x256xf32>
    %5 = vector.broadcast %4 : vector<1x256xf32> to vector<16x256xf32>
    %6 = arith.addf %3, %5 : vector<16x256xf32>
    %cst_5 = arith.constant 0.000000e+00 : f32
    %7 = vector.broadcast %cst_5 : f32 to vector<16x256xf32>
    %8 = arith.maximumf %6, %7 : vector<16x256xf32>
    %9 = arith.truncf %8 : vector<16x256xf32> to vector<16x256xbf16>
    %c0_6 = arith.constant 0 : index
    %c0_7 = arith.constant 0 : index
    %10 = vector.load %arg4[%c0_6, %c0_7] : memref<256x128xbf16, #tpu.memory_space<vmem>>, vector<256x128xbf16>
    %cst_8 = arith.constant dense<0.000000e+00> : vector<16x128xf32>
    %11 = tpu.matmul %9, %10, %cst_8 {dimension_numbers = #tpu.dot_dimension_numbers<[1], [0], [0], [1], [0, 0, 1, 1], [], []>} : vector<16x256xbf16>, vector<256x128xbf16>, vector<16x128xf32> -> vector<16x128xf32>
    %c0_9 = arith.constant 0 : index
    %c0_10 = arith.constant 0 : index
    %12 = vector.load %arg5[%c0_9, %c0_10] : memref<1x128xf32, #tpu.memory_space<vmem>>, vector<1x128xf32>
    %13 = vector.broadcast %12 : vector<1x128xf32> to vector<16x128xf32>
    %14 = arith.addf %11, %13 : vector<16x128xf32>
    %c0_11 = arith.constant 0 : index
    %c0_12 = arith.constant 0 : index
    %15 = vector.load %arg6[%c0_11, %c0_12] : memref<16x128xf32, #tpu.memory_space<vmem>>, vector<16x128xf32>
    tpu.vector_store %arg6[%c0_11, %c0_12], %14 {strides = array<i32>} : memref<16x128xf32, #tpu.memory_space<vmem>>, vector<16x128xf32>,
    return
  }
  func.func @transform_0(%arg0: i32) -> (i32, i32) {
    %c0_i32 = arith.constant 0 : i32
    %c0_i32_0 = arith.constant 0 : i32
    return %arg0, %c0_i32 : i32, i32
  }
  func.func @transform_1(%arg0: i32) -> (i32, i32) {
    %c0_i32 = arith.constant 0 : i32
    %c0_i32_0 = arith.constant 0 : i32
    %c0_i32_1 = arith.constant 0 : i32
    return %c0_i32, %c0_i32_0 : i32, i32
  }
  func.func @transform_2(%arg0: i32) -> (i32, i32) {
    %c0_i32 = arith.constant 0 : i32
    %c0_i32_0 = arith.constant 0 : i32
    %c0_i32_1 = arith.constant 0 : i32
    return %c0_i32, %c0_i32_0 : i32, i32
  }
  func.func @transform_3(%arg0: i32) -> (i32, i32) {
    %c0_i32 = arith.constant 0 : i32
    %c0_i32_0 = arith.constant 0 : i32
    %c0_i32_1 = arith.constant 0 : i32
    return %c0_i32, %c0_i32_0 : i32, i32
  }
  func.func @transform_4(%arg0: i32) -> (i32, i32) {
    %c0_i32 = arith.constant 0 : i32
    %c0_i32_0 = arith.constant 0 : i32
    %c0_i32_1 = arith.constant 0 : i32
    return %c0_i32, %c0_i32_0 : i32, i32
  }
  func.func @transform_5(%arg0: i32) -> (i32, i32) {
    %c0_i32 = arith.constant 0 : i32
    %c0_i32_0 = arith.constant 0 : i32
    return %arg0, %c0_i32 : i32, i32
  }
}

module attributes {stable_mosaic.version = 11 : i64} {
  func.func @_ffn_resident_kernel(%arg0: i32, %arg1: memref<16x128xf32, #tpu.memory_space<vmem>>, %arg2: memref<128x256xbf16, #tpu.memory_space<vmem>>, %arg3: memref<1x256xf32, #tpu.memory_space<vmem>>, %arg4: memref<256x128xbf16, #tpu.memory_space<vmem>>, %arg5: memref<1x128xf32, #tpu.memory_space<vmem>>, %arg6: memref<16x128xf32, #tpu.memory_space<vmem>>) attributes {dimension_semantics = [#tpu.dimension_semantics<parallel>], iteration_bounds = array<i64: 1>, scalar_prefetch = 0 : i64, scratch_operands = 0 : i64, tpu.core_type = #tpu.core_type<tc>, window_params = [{transform_indices = @transform_0, window_bounds = array<i64: 16, 128>}, {pipeline_mode = #tpu.pipeline_mode<synchronous>, transform_indices = @transform_1, window_bounds = array<i64: 128, 256>}, {pipeline_mode = #tpu.pipeline_mode<synchronous>, transform_indices = @transform_2, window_bounds = array<i64: 1, 256>}, {pipeline_mode = #tpu.pipeline_mode<synchronous>, transform_indices = @transform_3, window_bounds = array<i64: 256, 128>}, {pipeline_mode = #tpu.pipeline_mode<synchronous>, transform_indices = @transform_4, window_bounds = array<i64: 1, 128>}, {transform_indices = @transform_5, window_bounds = array<i64: 16, 128>}]} {
    %c0 = arith.constant 0 : index
    %c0_0 = arith.constant 0 : index
    %0 = vector.load %arg1[%c0, %c0_0] : memref<16x128xf32, #tpu.memory_space<vmem>>, vector<16x128xf32>
    %1 = arith.truncf %0 : vector<16x128xf32> to vector<16x128xbf16>
    %c0_1 = arith.constant 0 : index
    %c0_2 = arith.constant 0 : index
    %2 = vector.load %arg2[%c0_1, %c0_2] : memref<128x256xbf16, #tpu.memory_space<vmem>>, vector<128x256xbf16>
    %cst = arith.constant dense<0.000000e+00> : vector<16x256xf32>
    %3 = tpu.matmul %1, %2, %cst {dimension_numbers = #tpu.dot_dimension_numbers<[1], [0], [0], [1], [0, 0, 1, 1], [], []>} : vector<16x128xbf16>, vector<128x256xbf16>, vector<16x256xf32> -> vector<16x256xf32>
    %c0_3 = arith.constant 0 : index
    %c0_4 = arith.constant 0 : index
    %4 = vector.load %arg3[%c0_3, %c0_4] : memref<1x256xf32, #tpu.memory_space<vmem>>, vector<1x256xf32>
    %5 = vector.broadcast %4 : vector<1x256xf32> to vector<16x256xf32>
    %6 = arith.addf %3, %5 : vector<16x256xf32>
    %cst_5 = arith.constant 0.000000e+00 : f32
    %7 = vector.broadcast %cst_5 : f32 to vector<16x256xf32>
    %8 = arith.maximumf %6, %7 : vector<16x256xf32>
    %9 = arith.truncf %8 : vector<16x256xf32> to vector<16x256xbf16>
    %c0_6 = arith.constant 0 : index
    %c0_7 = arith.constant 0 : index
    %10 = vector.load %arg4[%c0_6, %c0_7] : memref<256x128xbf16, #tpu.memory_space<vmem>>, vector<256x128xbf16>
    %cst_8 = arith.constant dense<0.000000e+00> : vector<16x128xf32>
    %11 = tpu.matmul %9, %10, %cst_8 {dimension_numbers = #tpu.dot_dimension_numbers<[1], [0], [0], [1], [0, 0, 1, 1], [], []>} : vector<16x256xbf16>, vector<256x128xbf16>, vector<16x128xf32> -> vector<16x128xf32>
    %c0_9 = arith.constant 0 : index
    %c0_10 = arith.constant 0 : index
    %12 = vector.load %arg5[%c0_9, %c0_10] : memref<1x128xf32, #tpu.memory_space<vmem>>, vector<1x128xf32>
    %13 = vector.broadcast %12 : vector<1x128xf32> to vector<16x128xf32>
    %14 = arith.addf %11, %13 : vector<16x128xf32>
    %c0_11 = arith.constant 0 : index
    %c0_12 = arith.constant 0 : index
    %15 = vector.load %arg6[%c0_11, %c0_12] : memref<16x128xf32, #tpu.memory_space<vmem>>, vector<16x128xf32>
    tpu.vector_store %arg6[%c0_11, %c0_12], %14 {strides = array<i32>} : memref<16x128xf32, #tpu.memory_space<vmem>>, vector<16x128xf32>,
    return
  }
  func.func @transform_0(%arg0: i32) -> (i32, i32) {
    %c0_i32 = arith.constant 0 : i32
    %c0_i32_0 = arith.constant 0 : i32
    return %arg0, %c0_i32 : i32, i32
  }
  func.func @transform_1(%arg0: i32) -> (i32, i32) {
    %c0_i32 = arith.constant 0 : i32
    %c0_i32_0 = arith.constant 0 : i32
    %c0_i32_1 = arith.constant 0 : i32
    return %c0_i32, %c0_i32_0 : i32, i32
  }
  func.func @transform_2(%arg0: i32) -> (i32, i32) {
    %c0_i32 = arith.constant 0 : i32
    %c0_i32_0 = arith.constant 0 : i32
    %c0_i32_1 = arith.constant 0 : i32
    return %c0_i32, %c0_i32_0 : i32, i32
  }
  func.func @transform_3(%arg0: i32) -> (i32, i32) {
    %c0_i32 = arith.constant 0 : i32
    %c0_i32_0 = arith.constant 0 : i32
    %c0_i32_1 = arith.constant 0 : i32
    return %c0_i32, %c0_i32_0 : i32, i32
  }
  func.func @transform_4(%arg0: i32) -> (i32, i32) {
    %c0_i32 = arith.constant 0 : i32
    %c0_i32_0 = arith.constant 0 : i32
    %c0_i32_1 = arith.constant 0 : i32
    return %c0_i32, %c0_i32_0 : i32, i32
  }
  func.func @transform_5(%arg0: i32) -> (i32, i32) {
    %c0_i32 = arith.constant 0 : i32
    %c0_i32_0 = arith.constant 0 : i32
    return %arg0, %c0_i32 : i32, i32
  }
}

module attributes {stable_mosaic.version = 11 : i64} {
  func.func @_ffn_streamed_kernel(%arg0: i32, %arg1: i32, %arg2: memref<16x128xf32, #tpu.memory_space<vmem>>, %arg3: memref<128x256xbf16, #tpu.memory_space<vmem>>, %arg4: memref<1x256xf32, #tpu.memory_space<vmem>>, %arg5: memref<256x128xbf16, #tpu.memory_space<vmem>>, %arg6: memref<1x128xf32, #tpu.memory_space<vmem>>, %arg7: memref<16x128xf32, #tpu.memory_space<vmem>>, %arg8: memref<16x128xf32, #tpu.memory_space<vmem>>) attributes {dimension_semantics = [#tpu.dimension_semantics<parallel>, #tpu.dimension_semantics<arbitrary>], iteration_bounds = array<i64: 1, 1>, scalar_prefetch = 0 : i64, scratch_operands = 1 : i64, tpu.core_type = #tpu.core_type<tc>, window_params = [{transform_indices = @transform_0, window_bounds = array<i64: 16, 128>}, {transform_indices = @transform_1, window_bounds = array<i64: 128, 256>}, {transform_indices = @transform_2, window_bounds = array<i64: 1, 256>}, {transform_indices = @transform_3, window_bounds = array<i64: 256, 128>}, {pipeline_mode = #tpu.pipeline_mode<synchronous>, transform_indices = @transform_4, window_bounds = array<i64: 1, 128>}, {transform_indices = @transform_5, window_bounds = array<i64: 16, 128>}]} {
    %c0_i32 = arith.constant 0 : i32
    %0 = arith.cmpi eq, %arg1, %c0_i32 : i32
    %1 = arith.extui %0 : i1 to i32
    %c0_i32_0 = arith.constant 0 : i32
    %2 = arith.cmpi ne, %1, %c0_i32_0 : i32
    scf.if %2 {
      %cst_16 = arith.constant 0.000000e+00 : f32
      %21 = vector.broadcast %cst_16 : f32 to vector<16x128xf32>
      %c0_17 = arith.constant 0 : index
      %c0_18 = arith.constant 0 : index
      %22 = vector.load %arg8[%c0_17, %c0_18] : memref<16x128xf32, #tpu.memory_space<vmem>>, vector<16x128xf32>
      tpu.vector_store %arg8[%c0_17, %c0_18], %21 {strides = array<i32>} : memref<16x128xf32, #tpu.memory_space<vmem>>, vector<16x128xf32>,
    } else {
    }
    %c0 = arith.constant 0 : index
    %c0_1 = arith.constant 0 : index
    %3 = vector.load %arg2[%c0, %c0_1] : memref<16x128xf32, #tpu.memory_space<vmem>>, vector<16x128xf32>
    %4 = arith.truncf %3 : vector<16x128xf32> to vector<16x128xbf16>
    %c0_2 = arith.constant 0 : index
    %c0_3 = arith.constant 0 : index
    %5 = vector.load %arg3[%c0_2, %c0_3] : memref<128x256xbf16, #tpu.memory_space<vmem>>, vector<128x256xbf16>
    %cst = arith.constant dense<0.000000e+00> : vector<16x256xf32>
    %6 = tpu.matmul %4, %5, %cst {dimension_numbers = #tpu.dot_dimension_numbers<[1], [0], [0], [1], [0, 0, 1, 1], [], []>} : vector<16x128xbf16>, vector<128x256xbf16>, vector<16x256xf32> -> vector<16x256xf32>
    %c0_4 = arith.constant 0 : index
    %c0_5 = arith.constant 0 : index
    %7 = vector.load %arg4[%c0_4, %c0_5] : memref<1x256xf32, #tpu.memory_space<vmem>>, vector<1x256xf32>
    %8 = vector.broadcast %7 : vector<1x256xf32> to vector<16x256xf32>
    %9 = arith.addf %6, %8 : vector<16x256xf32>
    %cst_6 = arith.constant 0.000000e+00 : f32
    %10 = vector.broadcast %cst_6 : f32 to vector<16x256xf32>
    %11 = arith.maximumf %9, %10 : vector<16x256xf32>
    %c0_7 = arith.constant 0 : index
    %c0_8 = arith.constant 0 : index
    %12 = vector.load %arg8[%c0_7, %c0_8] : memref<16x128xf32, #tpu.memory_space<vmem>>, vector<16x128xf32>
    %13 = arith.truncf %11 : vector<16x256xf32> to vector<16x256xbf16>
    %c0_9 = arith.constant 0 : index
    %c0_10 = arith.constant 0 : index
    %14 = vector.load %arg5[%c0_9, %c0_10] : memref<256x128xbf16, #tpu.memory_space<vmem>>, vector<256x128xbf16>
    %cst_11 = arith.constant dense<0.000000e+00> : vector<16x128xf32>
    %15 = tpu.matmul %13, %14, %cst_11 {dimension_numbers = #tpu.dot_dimension_numbers<[1], [0], [0], [1], [0, 0, 1, 1], [], []>} : vector<16x256xbf16>, vector<256x128xbf16>, vector<16x128xf32> -> vector<16x128xf32>
    %16 = arith.addf %12, %15 : vector<16x128xf32>
    %c0_12 = arith.constant 0 : index
    %c0_13 = arith.constant 0 : index
    %17 = vector.load %arg8[%c0_12, %c0_13] : memref<16x128xf32, #tpu.memory_space<vmem>>, vector<16x128xf32>
    tpu.vector_store %arg8[%c0_12, %c0_13], %16 {strides = array<i32>} : memref<16x128xf32, #tpu.memory_space<vmem>>, vector<16x128xf32>,
    %c0_i32_14 = arith.constant 0 : i32
    %18 = arith.cmpi eq, %arg1, %c0_i32_14 : i32
    %19 = arith.extui %18 : i1 to i32
    %c0_i32_15 = arith.constant 0 : i32
    %20 = arith.cmpi ne, %19, %c0_i32_15 : i32
    scf.if %20 {
      %c0_16 = arith.constant 0 : index
      %c0_17 = arith.constant 0 : index
      %21 = vector.load %arg8[%c0_16, %c0_17] : memref<16x128xf32, #tpu.memory_space<vmem>>, vector<16x128xf32>
      %c0_18 = arith.constant 0 : index
      %c0_19 = arith.constant 0 : index
      %22 = vector.load %arg6[%c0_18, %c0_19] : memref<1x128xf32, #tpu.memory_space<vmem>>, vector<1x128xf32>
      %23 = vector.broadcast %22 : vector<1x128xf32> to vector<16x128xf32>
      %24 = arith.addf %21, %23 : vector<16x128xf32>
      %c0_20 = arith.constant 0 : index
      %c0_21 = arith.constant 0 : index
      %25 = vector.load %arg7[%c0_20, %c0_21] : memref<16x128xf32, #tpu.memory_space<vmem>>, vector<16x128xf32>
      tpu.vector_store %arg7[%c0_20, %c0_21], %24 {strides = array<i32>} : memref<16x128xf32, #tpu.memory_space<vmem>>, vector<16x128xf32>,
    } else {
    }
    return
  }
  func.func @transform_0(%arg0: i32, %arg1: i32) -> (i32, i32) {
    %c0_i32 = arith.constant 0 : i32
    %c0_i32_0 = arith.constant 0 : i32
    return %arg0, %c0_i32 : i32, i32
  }
  func.func @transform_1(%arg0: i32, %arg1: i32) -> (i32, i32) {
    %c0_i32 = arith.constant 0 : i32
    %c0_i32_0 = arith.constant 0 : i32
    return %c0_i32, %arg1 : i32, i32
  }
  func.func @transform_2(%arg0: i32, %arg1: i32) -> (i32, i32) {
    %c0_i32 = arith.constant 0 : i32
    %c0_i32_0 = arith.constant 0 : i32
    return %c0_i32, %arg1 : i32, i32
  }
  func.func @transform_3(%arg0: i32, %arg1: i32) -> (i32, i32) {
    %c0_i32 = arith.constant 0 : i32
    %c0_i32_0 = arith.constant 0 : i32
    return %arg1, %c0_i32 : i32, i32
  }
  func.func @transform_4(%arg0: i32, %arg1: i32) -> (i32, i32) {
    %c0_i32 = arith.constant 0 : i32
    %c0_i32_0 = arith.constant 0 : i32
    %c0_i32_1 = arith.constant 0 : i32
    return %c0_i32, %c0_i32_0 : i32, i32
  }
  func.func @transform_5(%arg0: i32, %arg1: i32) -> (i32, i32) {
    %c0_i32 = arith.constant 0 : i32
    %c0_i32_0 = arith.constant 0 : i32
    return %arg0, %c0_i32 : i32, i32
  }
}

</mosaic_0001>

<llo_original>
// kernel: tpu_custom_call.1
$region0: #{tpu_custom_call.1}
  #allocation0 [shape = 'u32[]', space=smem, size = 0x4, offset = 0x4, fixed_abs, tag = 'smem constant byte address 0x4 - core index']
  #allocation1 [shape = 'u32[144,128]{1,0:T(1,128)}', space=vmem, size = 0x12000, scoped, tag = 'internal scratch']
  %s0 = inlined_call_operand.hbm [shape: f32[16,128], index: 0, kind: input, shape index: {}]
  %s1 = inlined_call_operand.hbm [shape: bf16[128,256], index: 1, kind: input, shape index: {}]
  %s2 = inlined_call_operand.vmem [shape: f32[1,256], index: 2, kind: input, shape index: {}]
  %s3 = inlined_call_operand.hbm [shape: bf16[256,128], index: 3, kind: input, shape index: {}]
  %s4 = inlined_call_operand.vmem [shape: f32[1,128], index: 4, kind: input, shape index: {}]
  %s5 = inlined_call_operand.hbm [shape: f32[16,128], index: 5, kind: output, shape index: {}]
  %s6 = sld [smem:[#allocation0]]
  $region42: #{tpu_custom_call.1} parent=0
    _
  %s8 = ssub.s32 1, %s6
  %s9 = scalar_select 0, %s8, %s6
  $region1: #{tpu_custom_call.1} parent=0
    #allocation2 [shape = 'u8[8192]{0}', space=vmem, size = 0x2000, scoped, tag = 'input window, operand 0, single buffered']
    #allocation3 [shape = 's32[1]{0}', space=sflag, size = 0x4, scoped, tag = 'scoped memory for tpu_custom_call.1']
    #allocation4 [shape = 's32[1]{0}', space=sflag, size = 0x4, scoped, tag = 'scoped memory for tpu_custom_call.1']
    #allocation5 [shape = 'u8[65536]{0}', space=vmem, size = 0x10000, scoped, tag = 'input window, operand 1, single buffered']
    #allocation6 [shape = 's32[1]{0}', space=sflag, size = 0x4, scoped, tag = 'scoped memory for tpu_custom_call.1']
    #allocation7 [shape = 'u8[65536]{0}', space=vmem, size = 0x10000, scoped, tag = 'input window, operand 3, single buffered']
    #allocation8 [shape = 'u8[8192]{0}', space=vmem, size = 0x2000, scoped, tag = 'output window, operand 0, single buffered']
    %10 = vsyncpa [#allocation3], 0
    %11 = vsyncpa [#allocation6], 0
    %12 = vsyncpa [#allocation4], 0
    // Predicated region
    $region2: #{tpu_custom_call.1} parent=1 // pred_check
      _
    $region3: #{tpu_custom_call.1} parent=1 // pred_check_branch
      %14 = sbr.rel (0) target = $region5
    $region4: #{tpu_custom_call.1} parent=1 // pred_region
      %s16 = ssub.s32 256, 256
      %17 = vsyncadd [#allocation3], %s16
      %s18 = sshll.u32 [#allocation2], 4
      %s19 = int_to_ptr.vmem [resolvable:$true] %s18
      %24 = dma.hbm_to_vmem [thread:$0]  %s0, 256, %s19, [#allocation3], 128, 128, 8
    $region5: #{tpu_custom_call.1} parent=1 // pred_fallthru
      _
    // Predicated region
    $region6: #{tpu_custom_call.1} parent=1 // pred_check
      _
    $region7: #{tpu_custom_call.1} parent=1 // pred_check_branch
      %26 = sbr.rel (0) target = $region9
    $region8: #{tpu_custom_call.1} parent=1 // pred_region
      %s28 = ssub.s32 2048, 2048
      %29 = vsyncadd [#allocation6], %s28
      %s30 = sshll.u32 [#allocation5], 4
      %s31 = int_to_ptr.vmem [resolvable:$true] %s30
      %36 = dma.hbm_to_vmem [thread:$0]  %s1, 2048, %s31, [#allocation6], 128, 128, 8
    $region9: #{tpu_custom_call.1} parent=1 // pred_fallthru
      _
    // Predicated region
    $region10: #{tpu_custom_call.1} parent=1 // pred_check
      _
    $region11: #{tpu_custom_call.1} parent=1 // pred_check_branch
      %38 = sbr.rel (0) target = $region13
    $region12: #{tpu_custom_call.1} parent=1 // pred_region
      _
    $region13: #{tpu_custom_call.1} parent=1 // pred_fallthru
      _
    // Predicated region
    $region14: #{tpu_custom_call.1} parent=1 // pred_check
      _
    $region15: #{tpu_custom_call.1} parent=1 // pred_check_branch
      %40 = sbr.rel (0) target = $region17
    $region16: #{tpu_custom_call.1} parent=1 // pred_region
      %s42 = ssub.s32 2048, 2048
      %43 = vsyncadd [#allocation6], %s42
      %s44 = sshll.u32 [#allocation7], 4
      %s45 = int_to_ptr.vmem [resolvable:$true] %s44
      %50 = dma.hbm_to_vmem [thread:$0]  %s3, 2048, %s45, [#allocation6], 64, 64, 4
    $region17: #{tpu_custom_call.1} parent=1 // pred_fallthru
      _
    // Predicated region
    $region18: #{tpu_custom_call.1} parent=1 // pred_check
      _
    $region19: #{tpu_custom_call.1} parent=1 // pred_check_branch
      %52 = sbr.rel (0) target = $region21
    $region20: #{tpu_custom_call.1} parent=1 // pred_region
      _
    $region21: #{tpu_custom_call.1} parent=1 // pred_fallthru
      _
    // Predicated region
    $region22: #{tpu_custom_call.1} parent=1 // pred_check
      _
    $region23: #{tpu_custom_call.1} parent=1 // pred_check_branch
      %54 = sbr.rel (0) target = $region25
    $region24: #{tpu_custom_call.1} parent=1 // pred_region
      %55 = dma.done [#allocation3], 256
    $region25: #{tpu_custom_call.1} parent=1 // pred_fallthru
      _
    // Predicated region
    $region26: #{tpu_custom_call.1} parent=1 // pred_check
      _
    $region27: #{tpu_custom_call.1} parent=1 // pred_check_branch
      %57 = sbr.rel (0) target = $region29
    $region28: #{tpu_custom_call.1} parent=1 // pred_region
      %58 = dma.done [#allocation6], 2048
    $region29: #{tpu_custom_call.1} parent=1 // pred_fallthru
      _
    // Predicated region
    $region30: #{tpu_custom_call.1} parent=1 // pred_check
      _
    $region31: #{tpu_custom_call.1} parent=1 // pred_check_branch
      %60 = sbr.rel (0) target = $region33
    $region32: #{tpu_custom_call.1} parent=1 // pred_region
      %61 = dma.done [#allocation6], 2048
    $region33: #{tpu_custom_call.1} parent=1 // pred_fallthru
      _
    %v63 = vld [vmem:[#allocation2] sm:$0xff]
    %v64 = vld [vmem:[#allocation2 + $0x8] sm:$0xff]
    %v65 = vpack.c.bf16 %v64, %v63
    %v66 = vld [vmem:[#allocation5] sm:$0xff]
    %v67 = vld [vmem:[#allocation5 + $0x8] sm:$0xff]
    %v68 = vld [vmem:[#allocation5 + $0x10] sm:$0xff]
    %v69 = vld [vmem:[#allocation5 + $0x18] sm:$0xff]
    %v70 = vld [vmem:[#allocation5 + $0x20] sm:$0xff]
    %v71 = vld [vmem:[#allocation5 + $0x28] sm:$0xff]
    %v72 = vld [vmem:[#allocation5 + $0x30] sm:$0xff]
    %v73 = vld [vmem:[#allocation5 + $0x38] sm:$0xff]
    %v74 = vld [vmem:[#allocation5 + $0x40] sm:$0xff]
    %v75 = vld [vmem:[#allocation5 + $0x48] sm:$0xff]
    %v76 = vld [vmem:[#allocation5 + $0x50] sm:$0xff]
    %v77 = vld [vmem:[#allocation5 + $0x58] sm:$0xff]
    %v78 = vld [vmem:[#allocation5 + $0x60] sm:$0xff]
    %v79 = vld [vmem:[#allocation5 + $0x68] sm:$0xff]
    %v80 = vld [vmem:[#allocation5 + $0x70] sm:$0xff]
    %v81 = vld [vmem:[#allocation5 + $0x78] sm:$0xff]
    %v82 = vld [vmem:[%s2] sm:$0x3]
    %v84 = vlaneseq
    %v85 = vshrl.u32 %v84, 7
    %v86 = vsub.s32 0, %v85
    %v87 = vrot.slane %v82, %v86
    %v88 = vlaneseq
    %v89 = vshrl.u32 %v88, 7
    %v90 = vsub.s32 1, %v89
    %v91 = vrot.slane %v82, %v90
    %v110 = vunpack.c.l.b16 %v66
    %v111 = vunpack.c.h.b16 %v66
    %v112 = vunpack.c.l.b16 %v67
    %v113 = vunpack.c.h.b16 %v67
    %v114 = vunpack.c.l.b16 %v68
    %v115 = vunpack.c.h.b16 %v68
    %v116 = vunpack.c.l.b16 %v69
    %v117 = vunpack.c.h.b16 %v69
    %v118 = vunpack.c.l.b16 %v70
    %v119 = vunpack.c.h.b16 %v70
    %v120 = vunpack.c.l.b16 %v71
    %v121 = vunpack.c.h.b16 %v71
    %v122 = vunpack.c.l.b16 %v72
    %v123 = vunpack.c.h.b16 %v72
    %v124 = vunpack.c.l.b16 %v73
    %v125 = vunpack.c.h.b16 %v73
    %v126 = vunpack.c.l.b16 %v74
    %v127 = vunpack.c.h.b16 %v74
    %v128 = vunpack.c.l.b16 %v75
    %v129 = vunpack.c.h.b16 %v75
    %v130 = vunpack.c.l.b16 %v76
    %v131 = vunpack.c.h.b16 %v76
    %v132 = vunpack.c.l.b16 %v77
    %v133 = vunpack.c.h.b16 %v77
    %v134 = vunpack.c.l.b16 %v78
    %v135 = vunpack.c.h.b16 %v78
    %v136 = vunpack.c.l.b16 %v79
    %v137 = vunpack.c.h.b16 %v79
    %v138 = vunpack.c.l.b16 %v80
    %v139 = vunpack.c.h.b16 %v80
    %v140 = vunpack.c.l.b16 %v81
    %v141 = vunpack.c.h.b16 %v81
    %v142 = vpack.c.b16 %v112, %v110
    %v143 = vpack.c.b16 %v113, %v111
    %v144 = vpack.c.b16 %v116, %v114
    %v145 = vpack.c.b16 %v117, %v115
    %v146 = vpack.c.b16 %v120, %v118
    %v147 = vpack.c.b16 %v121, %v119
    %v148 = vpack.c.b16 %v124, %v122
    %v149 = vpack.c.b16 %v125, %v123
    %v150 = vpack.c.b16 %v128, %v126
    %v151 = vpack.c.b16 %v129, %v127
    %v152 = vpack.c.b16 %v132, %v130
    %v153 = vpack.c.b16 %v133, %v131
    %v154 = vpack.c.b16 %v136, %v134
    %v155 = vpack.c.b16 %v137, %v135
    %v156 = vpack.c.b16 %v140, %v138
    %v157 = vpack.c.b16 %v141, %v139
    %174 = vmatprep.subr.bf16.mxu0 %v143
    %175 = vmatpush1.bf16.msra.mxu0 %v142
    %176 = vmatprep.subr.bf16.mxu0 %v145
    %177 = vmatpush1.bf16.msra.mxu0 %v144
    %178 = vmatprep.subr.bf16.mxu0 %v147
    %179 = vmatpush1.bf16.msra.mxu0 %v146
    %180 = vmatprep.subr.bf16.mxu0 %v149
    %181 = vmatpush1.bf16.msra.mxu0 %v148
    %182 = vmatprep.subr.bf16.mxu0 %v151
    %183 = vmatpush1.bf16.msra.mxu0 %v150
    %184 = vmatprep.subr.bf16.mxu0 %v153
    %185 = vmatpush1.bf16.msra.mxu0 %v152
    %186 = vmatprep.subr.bf16.mxu0 %v155
    %187 = vmatpush1.bf16.msra.mxu0 %v154
    %188 = vmatprep.subr.bf16.mxu0 %v157
    %189 = vmatpush1.bf16.msra.mxu0 %v156
    %190 = vmatprep.subr.bf16.mxu0 0
    %191 = vmatpush1.bf16.msra.mxu0 0
    %192 = vmatprep.subr.bf16.mxu0 0
    %193 = vmatpush1.bf16.msra.mxu0 0
    %194 = vmatprep.subr.bf16.mxu0 0
    %195 = vmatpush1.bf16.msra.mxu0 0
    %196 = vmatprep.subr.bf16.mxu0 0
    %197 = vmatpush1.bf16.msra.mxu0 0
    %198 = vmatprep.subr.bf16.mxu0 0
    %199 = vmatpush1.bf16.msra.mxu0 0
    %200 = vmatprep.subr.bf16.mxu0 0
    %201 = vmatpush1.bf16.msra.mxu0 0
    %202 = vmatprep.subr.bf16.mxu0 0
    %203 = vmatpush1.bf16.msra.mxu0 0
    %204 = vmatprep.subr.bf16.mxu0 0
    %205 = vmatpush1.bf16.msra.mxu0 0
    %206 = vmatprep.mubr.bf16.mxu0 0
    %207 = vmatmul.mubr.bf16.gmra.mrb[0].mxu0 %v65
    %v208 = vpop.f32.mrb[0].mxu0
    %v209 = vadd.f32 %v87, %v208
    %v210 = vpop.f32.mrb[0].mxu0
    %v211 = vadd.f32 %v91, %v210
    %v212 = vpop.f32.mrb[0].mxu0
    %v213 = vadd.f32 %v87, %v212
    %v214 = vpop.f32.mrb[0].mxu0
    %v215 = vadd.f32 %v91, %v214
    %216 = vdwg.mxu0
    %v217 = vmax.f32 %v209, 0.0
    %v218 = vmax.f32 %v211, 0.0
    %v219 = vmax.f32 %v213, 0.0
    %v220 = vmax.f32 %v215, 0.0
    %v221 = vpack.c.bf16 %v219, %v217
    %v222 = vpack.c.bf16 %v220, %v218
    %v223 = vld [vmem:[#allocation7] sm:$0xf]
    %v224 = vld [vmem:[#allocation7 + $0x4] sm:$0xf]
    %v225 = vld [vmem:[#allocation7 + $0x8] sm:$0xf]
    %v226 = vld [vmem:[#allocation7 + $0xc] sm:$0xf]
    %v227 = vld [vmem:[#allocation7 + $0x10] sm:$0xf]
    %v228 = vld [vmem:[#allocation7 + $0x14] sm:$0xf]
    %v229 = vld [vmem:[#allocation7 + $0x18] sm:$0xf]
    %v230 = vld [vmem:[#allocation7 + $0x1c] sm:$0xf]
    %v231 = vld [vmem:[#allocation7 + $0x20] sm:$0xf]
    %v232 = vld [vmem:[#allocation7 + $0x24] sm:$0xf]
    %v233 = vld [vmem:[#allocation7 + $0x28] sm:$0xf]
    %v234 = vld [vmem:[#allocation7 + $0x2c] sm:$0xf]
    %v235 = vld [vmem:[#allocation7 + $0x30] sm:$0xf]
    %v236 = vld [vmem:[#allocation7 + $0x34] sm:$0xf]
    %v237 = vld [vmem:[#allocation7 + $0x38] sm:$0xf]
    %v238 = vld [vmem:[#allocation7 + $0x3c] sm:$0xf]
    %v239 = vld [vmem:[#allocation7 + $0x40] sm:$0xf]
    %v240 = vld [vmem:[#allocation7 + $0x44] sm:$0xf]
    %v241 = vld [vmem:[#allocation7 + $0x48] sm:$0xf]
    %v242 = vld [vmem:[#allocation7 + $0x4c] sm:$0xf]
    %v243 = vld [vmem:[#allocation7 + $0x50] sm:$0xf]
    %v244 = vld [vmem:[#allocation7 + $0x54] sm:$0xf]
    %v245 = vld [vmem:[#allocation7 + $0x58] sm:$0xf]
    %v246 = vld [vmem:[#allocation7 + $0x5c] sm:$0xf]
    %v247 = vld [vmem:[#allocation7 + $0x60] sm:$0xf]
    %v248 = vld [vmem:[#allocation7 + $0x64] sm:$0xf]
    %v249 = vld [vmem:[#allocation7 + $0x68] sm:$0xf]
    %v250 = vld [vmem:[#allocation7 + $0x6c] sm:$0xf]
    %v251 = vld [vmem:[#allocation7 + $0x70] sm:$0xf]
    %v252 = vld [vmem:[#allocation7 + $0x74] sm:$0xf]
    %v253 = vld [vmem:[#allocation7 + $0x78] sm:$0xf]
    %v254 = vld [vmem:[#allocation7 + $0x7c] sm:$0xf]
    %v255 = vld [vmem:[%s4] sm:$0x1]
    %v257 = vlaneseq
    %v258 = vshrl.u32 %v257, 7
    %v259 = vsub.s32 0, %v258
    %v260 = vrot.slane %v255, %v259
    %v294 = vunpack.c.l.b16 %v223
    %v295 = vunpack.c.l.b16 %v224
    %v296 = vunpack.c.l.b16 %v225
    %v297 = vunpack.c.l.b16 %v226
    %v298 = vunpack.c.l.b16 %v227
    %v299 = vunpack.c.l.b16 %v228
    %v300 = vunpack.c.l.b16 %v229
    %v301 = vunpack.c.l.b16 %v230
    %v302 = vunpack.c.l.b16 %v231
    %v303 = vunpack.c.l.b16 %v232
    %v304 = vunpack.c.l.b16 %v233
    %v305 = vunpack.c.l.b16 %v234
    %v306 = vunpack.c.l.b16 %v235
    %v307 = vunpack.c.l.b16 %v236
    %v308 = vunpack.c.l.b16 %v237
    %v309 = vunpack.c.l.b16 %v238
    %v310 = vunpack.c.l.b16 %v239
    %v311 = vunpack.c.l.b16 %v240
    %v312 = vunpack.c.l.b16 %v241
    %v313 = vunpack.c.l.b16 %v242
    %v314 = vunpack.c.l.b16 %v243
    %v315 = vunpack.c.l.b16 %v244
    %v316 = vunpack.c.l.b16 %v245
    %v317 = vunpack.c.l.b16 %v246
    %v318 = vunpack.c.l.b16 %v247
    %v319 = vunpack.c.l.b16 %v248
    %v320 = vunpack.c.l.b16 %v249
    %v321 = vunpack.c.l.b16 %v250
    %v322 = vunpack.c.l.b16 %v251
    %v323 = vunpack.c.l.b16 %v252
    %v324 = vunpack.c.l.b16 %v253
    %v325 = vunpack.c.l.b16 %v254
    %v326 = vpack.c.b16 %v295, %v294
    %v327 = vpack.c.b16 %v297, %v296
    %v328 = vpack.c.b16 %v299, %v298
    %v329 = vpack.c.b16 %v301, %v300
    %v330 = vpack.c.b16 %v303, %v302
    %v331 = vpack.c.b16 %v305, %v304
    %v332 = vpack.c.b16 %v307, %v306
    %v333 = vpack.c.b16 %v309, %v308
    %v334 = vpack.c.b16 %v311, %v310
    %v335 = vpack.c.b16 %v313, %v312
    %v336 = vpack.c.b16 %v315, %v314
    %v337 = vpack.c.b16 %v317, %v316
    %v338 = vpack.c.b16 %v319, %v318
    %v339 = vpack.c.b16 %v321, %v320
    %v340 = vpack.c.b16 %v323, %v322
    %v341 = vpack.c.b16 %v325, %v324
    %358 = vmatprep.subr.bf16.mxu0 0
    %359 = vmatpush1.bf16.msra.mxu0 %v326
    %360 = vmatprep.subr.bf16.mxu0 0
    %361 = vmatpush1.bf16.msra.mxu0 %v327
    %362 = vmatprep.subr.bf16.mxu0 0
    %363 = vmatpush1.bf16.msra.mxu0 %v328
    %364 = vmatprep.subr.bf16.mxu0 0
    %365 = vmatpush1.bf16.msra.mxu0 %v329
    %366 = vmatprep.subr.bf16.mxu0 0
    %367 = vmatpush1.bf16.msra.mxu0 %v330
    %368 = vmatprep.subr.bf16.mxu0 0
    %369 = vmatpush1.bf16.msra.mxu0 %v331
    %370 = vmatprep.subr.bf16.mxu0 0
    %371 = vmatpush1.bf16.msra.mxu0 %v332
    %372 = vmatprep.subr.bf16.mxu0 0
    %373 = vmatpush1.bf16.msra.mxu0 %v333
    %374 = vmatprep.subr.bf16.mxu0 0
    %375 = vmatpush1.bf16.msra.mxu0 %v334
    %376 = vmatprep.subr.bf16.mxu0 0
    %377 = vmatpush1.bf16.msra.mxu0 %v335
    %378 = vmatprep.subr.bf16.mxu0 0
    %379 = vmatpush1.bf16.msra.mxu0 %v336
    %380 = vmatprep.subr.bf16.mxu0 0
    %381 = vmatpush1.bf16.msra.mxu0 %v337
    %382 = vmatprep.subr.bf16.mxu0 0
    %383 = vmatpush1.bf16.msra.mxu0 %v338
    %384 = vmatprep.subr.bf16.mxu0 0
    %385 = vmatpush1.bf16.msra.mxu0 %v339
    %386 = vmatprep.subr.bf16.mxu0 0
    %387 = vmatpush1.bf16.msra.mxu0 %v340
    %388 = vmatprep.subr.bf16.mxu0 0
    %389 = vmatpush1.bf16.msra.mxu0 %v341
    %390 = vmatprep.mubr.bf16.mxu0 %v222
    %391 = vmatmul.mubr.bf16.gmra.mrb[0].mxu0 %v221
    %v392 = vpop.f32.mrb[0].mxu0
    %v393 = vadd.f32 %v260, %v392
    %v394 = vpop.f32.mrb[0].mxu0
    %v395 = vpop.f32.mrb[0].mxu0
    %v396 = vadd.f32 %v260, %v395
    %v397 = vpop.f32.mrb[0].mxu0
    %398 = vdwg.mxu0
    %399 = vst [vmem:[#allocation8] sm:$0xff] %v393
    %400 = vst [vmem:[#allocation8 + $0x8] sm:$0xff] %v396
    // Predicated region
    $region34: #{tpu_custom_call.1} parent=1 // pred_check
      _
    $region35: #{tpu_custom_call.1} parent=1 // pred_check_branch
      %402 = sbr.rel (0) target = $region37
    $region36: #{tpu_custom_call.1} parent=1 // pred_region
      %s404 = ssub.s32 256, 256
      %405 = vsyncadd [#allocation4], %s404
      %s406 = sshll.u32 [#allocation8], 4
      %s407 = int_to_ptr.vmem [resolvable:$true] %s406
      %412 = dma.vmem_to_hbm [thread:$0]  %s407, 256, %s5, [#allocation4], 128, 128, 8
    $region37: #{tpu_custom_call.1} parent=1 // pred_fallthru
      _
    // Predicated region
    $region38: #{tpu_custom_call.1} parent=1 // pred_check
      _
    $region39: #{tpu_custom_call.1} parent=1 // pred_check_branch
      %414 = sbr.rel (0) target = $region41
    $region40: #{tpu_custom_call.1} parent=1 // pred_region
      %415 = dma.done [#allocation4], 256
    $region41: #{tpu_custom_call.1} parent=1 // pred_fallthru
      _
    %416 = vsyncpa [#allocation3], 1
    %417 = vsyncpa [#allocation6], 1
    %418 = vsyncpa [#allocation4], 1

// kernel: tpu_custom_call.1
$region0: #{tpu_custom_call.1}
  #allocation0 [shape = 'u32[]', space=smem, size = 0x4, offset = 0x4, fixed_abs, tag = 'smem constant byte address 0x4 - core index']
  #allocation1 [shape = 'u32[144,128]{1,0:T(1,128)}', space=vmem, size = 0x12000, scoped, tag = 'internal scratch']
  %s0 = inlined_call_operand.hbm [shape: f32[16,128], index: 0, kind: input, shape index: {}]
  %s1 = inlined_call_operand.hbm [shape: bf16[128,256], index: 1, kind: input, shape index: {}]
  %s2 = inlined_call_operand.vmem [shape: f32[1,256], index: 2, kind: input, shape index: {}]
  %s3 = inlined_call_operand.hbm [shape: bf16[256,128], index: 3, kind: input, shape index: {}]
  %s4 = inlined_call_operand.vmem [shape: f32[1,128], index: 4, kind: input, shape index: {}]
  %s5 = inlined_call_operand.hbm [shape: f32[16,128], index: 5, kind: output, shape index: {}]
  %s6 = sld [smem:[#allocation0]]
  $region42: #{tpu_custom_call.1} parent=0
    _
  %s8 = ssub.s32 1, %s6
  %s9 = scalar_select 0, %s8, %s6
  $region1: #{tpu_custom_call.1} parent=0
    #allocation2 [shape = 'u8[8192]{0}', space=vmem, size = 0x2000, scoped, tag = 'input window, operand 0, single buffered']
    #allocation3 [shape = 's32[1]{0}', space=sflag, size = 0x4, scoped, tag = 'scoped memory for tpu_custom_call.1']
    #allocation4 [shape = 's32[1]{0}', space=sflag, size = 0x4, scoped, tag = 'scoped memory for tpu_custom_call.1']
    #allocation5 [shape = 'u8[65536]{0}', space=vmem, size = 0x10000, scoped, tag = 'input window, operand 1, single buffered']
    #allocation6 [shape = 's32[1]{0}', space=sflag, size = 0x4, scoped, tag = 'scoped memory for tpu_custom_call.1']
    #allocation7 [shape = 'u8[65536]{0}', space=vmem, size = 0x10000, scoped, tag = 'input window, operand 3, single buffered']
    #allocation8 [shape = 'u8[8192]{0}', space=vmem, size = 0x2000, scoped, tag = 'output window, operand 0, single buffered']
    %10 = vsyncpa [#allocation3], 0
    %11 = vsyncpa [#allocation6], 0
    %12 = vsyncpa [#allocation4], 0
    // Predicated region
    $region2: #{tpu_custom_call.1} parent=1 // pred_check
      _
    $region3: #{tpu_custom_call.1} parent=1 // pred_check_branch
      %14 = sbr.rel (0) target = $region5
    $region4: #{tpu_custom_call.1} parent=1 // pred_region
      %s16 = ssub.s32 256, 256
      %17 = vsyncadd [#allocation3], %s16
      %s18 = sshll.u32 [#allocation2], 4
      %s19 = int_to_ptr.vmem [resolvable:$true] %s18
      %24 = dma.hbm_to_vmem [thread:$0]  %s0, 256, %s19, [#allocation3], 128, 128, 8
    $region5: #{tpu_custom_call.1} parent=1 // pred_fallthru
      _
    // Predicated region
    $region6: #{tpu_custom_call.1} parent=1 // pred_check
      _
    $region7: #{tpu_custom_call.1} parent=1 // pred_check_branch
      %26 = sbr.rel (0) target = $region9
    $region8: #{tpu_custom_call.1} parent=1 // pred_region
      %s28 = ssub.s32 2048, 2048
      %29 = vsyncadd [#allocation6], %s28
      %s30 = sshll.u32 [#allocation5], 4
      %s31 = int_to_ptr.vmem [resolvable:$true] %s30
      %36 = dma.hbm_to_vmem [thread:$0]  %s1, 2048, %s31, [#allocation6], 128, 128, 8
    $region9: #{tpu_custom_call.1} parent=1 // pred_fallthru
      _
    // Predicated region
    $region10: #{tpu_custom_call.1} parent=1 // pred_check
      _
    $region11: #{tpu_custom_call.1} parent=1 // pred_check_branch
      %38 = sbr.rel (0) target = $region13
    $region12: #{tpu_custom_call.1} parent=1 // pred_region
      _
    $region13: #{tpu_custom_call.1} parent=1 // pred_fallthru
      _
    // Predicated region
    $region14: #{tpu_custom_call.1} parent=1 // pred_check
      _
    $region15: #{tpu_custom_call.1} parent=1 // pred_check_branch
      %40 = sbr.rel (0) target = $region17
    $region16: #{tpu_custom_call.1} parent=1 // pred_region
      %s42 = ssub.s32 2048, 2048
      %43 = vsyncadd [#allocation6], %s42
      %s44 = sshll.u32 [#allocation7], 4
      %s45 = int_to_ptr.vmem [resolvable:$true] %s44
      %50 = dma.hbm_to_vmem [thread:$0]  %s3, 2048, %s45, [#allocation6], 64, 64, 4
    $region17: #{tpu_custom_call.1} parent=1 // pred_fallthru
      _
    // Predicated region
    $region18: #{tpu_custom_call.1} parent=1 // pred_check
      _
    $region19: #{tpu_custom_call.1} parent=1 // pred_check_branch
      %52 = sbr.rel (0) target = $region21
    $region20: #{tpu_custom_call.1} parent=1 // pred_region
      _
    $region21: #{tpu_custom_call.1} parent=1 // pred_fallthru
      _
    // Predicated region
    $region22: #{tpu_custom_call.1} parent=1 // pred_check
      _
    $region23: #{tpu_custom_call.1} parent=1 // pred_check_branch
      %54 = sbr.rel (0) target = $region25
    $region24: #{tpu_custom_call.1} parent=1 // pred_region
      %55 = dma.done [#allocation3], 256
    $region25: #{tpu_custom_call.1} parent=1 // pred_fallthru
      _
    // Predicated region
    $region26: #{tpu_custom_call.1} parent=1 // pred_check
      _
    $region27: #{tpu_custom_call.1} parent=1 // pred_check_branch
      %57 = sbr.rel (0) target = $region29
    $region28: #{tpu_custom_call.1} parent=1 // pred_region
      %58 = dma.done [#allocation6], 2048
    $region29: #{tpu_custom_call.1} parent=1 // pred_fallthru
      _
    // Predicated region
    $region30: #{tpu_custom_call.1} parent=1 // pred_check
      _
    $region31: #{tpu_custom_call.1} parent=1 // pred_check_branch
      %60 = sbr.rel (0) target = $region33
    $region32: #{tpu_custom_call.1} parent=1 // pred_region
      %61 = dma.done [#allocation6], 2048
    $region33: #{tpu_custom_call.1} parent=1 // pred_fallthru
      _
    %v63 = vld [vmem:[#allocation2] sm:$0xff]
    %v64 = vld [vmem:[#allocation2 + $0x8] sm:$0xff]
    %v65 = vpack.c.bf16 %v64, %v63
    %v66 = vld [vmem:[#allocation5] sm:$0xff]
    %v67 = vld [vmem:[#allocation5 + $0x8] sm:$0xff]
    %v68 = vld [vmem:[#allocation5 + $0x10] sm:$0xff]
    %v69 = vld [vmem:[#allocation5 + $0x18] sm:$0xff]
    %v70 = vld [vmem:[#allocation5 + $0x20] sm:$0xff]
    %v71 = vld [vmem:[#allocation5 + $0x28] sm:$0xff]
    %v72 = vld [vmem:[#allocation5 + $0x30] sm:$0xff]
    %v73 = vld [vmem:[#allocation5 + $0x38] sm:$0xff]
    %v74 = vld [vmem:[#allocation5 + $0x40] sm:$0xff]
    %v75 = vld [vmem:[#allocation5 + $0x48] sm:$0xff]
    %v76 = vld [vmem:[#allocation5 + $0x50] sm:$0xff]
    %v77 = vld [vmem:[#allocation5 + $0x58] sm:$0xff]
    %v78 = vld [vmem:[#allocation5 + $0x60] sm:$0xff]
    %v79 = vld [vmem:[#allocation5 + $0x68] sm:$0xff]
    %v80 = vld [vmem:[#allocation5 + $0x70] sm:$0xff]
    %v81 = vld [vmem:[#allocation5 + $0x78] sm:$0xff]
    %v82 = vld [vmem:[%s2] sm:$0x3]
    %v84 = vlaneseq
    %v85 = vshrl.u32 %v84, 7
    %v86 = vsub.s32 0, %v85
    %v87 = vrot.slane %v82, %v86
    %v88 = vlaneseq
    %v89 = vshrl.u32 %v88, 7
    %v90 = vsub.s32 1, %v89
    %v91 = vrot.slane %v82, %v90
    %v110 = vunpack.c.l.b16 %v66
    %v111 = vunpack.c.h.b16 %v66
    %v112 = vunpack.c.l.b16 %v67
    %v113 = vunpack.c.h.b16 %v67
    %v114 = vunpack.c.l.b16 %v68
    %v115 = vunpack.c.h.b16 %v68
    %v116 = vunpack.c.l.b16 %v69
    %v117 = vunpack.c.h.b16 %v69
    %v118 = vunpack.c.l.b16 %v70
    %v119 = vunpack.c.h.b16 %v70
    %v120 = vunpack.c.l.b16 %v71
    %v121 = vunpack.c.h.b16 %v71
    %v122 = vunpack.c.l.b16 %v72
    %v123 = vunpack.c.h.b16 %v72
    %v124 = vunpack.c.l.b16 %v73
    %v125 = vunpack.c.h.b16 %v73
    %v126 = vunpack.c.l.b16 %v74
    %v127 = vunpack.c.h.b16 %v74
    %v128 = vunpack.c.l.b16 %v75
    %v129 = vunpack.c.h.b16 %v75
    %v130 = vunpack.c.l.b16 %v76
    %v131 = vunpack.c.h.b16 %v76
    %v132 = vunpack.c.l.b16 %v77
    %v133 = vunpack.c.h.b16 %v77
    %v134 = vunpack.c.l.b16 %v78
    %v135 = vunpack.c.h.b16 %v78
    %v136 = vunpack.c.l.b16 %v79
    %v137 = vunpack.c.h.b16 %v79
    %v138 = vunpack.c.l.b16 %v80
    %v139 = vunpack.c.h.b16 %v80
    %v140 = vunpack.c.l.b16 %v81
    %v141 = vunpack.c.h.b16 %v81
    %v142 = vpack.c.b16 %v112, %v110
    %v143 = vpack.c.b16 %v113, %v111
    %v144 = vpack.c.b16 %v116, %v114
    %v145 = vpack.c.b16 %v117, %v115
    %v146 = vpack.c.b16 %v120, %v118
    %v147 = vpack.c.b16 %v121, %v119
    %v148 = vpack.c.b16 %v124, %v122
    %v149 = vpack.c.b16 %v125, %v123
    %v150 = vpack.c.b16 %v128, %v126
    %v151 = vpack.c.b16 %v129, %v127
    %v152 = vpack.c.b16 %v132, %v130
    %v153 = vpack.c.b16 %v133, %v131
    %v154 = vpack.c.b16 %v136, %v134
    %v155 = vpack.c.b16 %v137, %v135
    %v156 = vpack.c.b16 %v140, %v138
    %v157 = vpack.c.b16 %v141, %v139
    %174 = vmatprep.subr.bf16.mxu0 %v143
    %175 = vmatpush1.bf16.msra.mxu0 %v142
    %176 = vmatprep.subr.bf16.mxu0 %v145
    %177 = vmatpush1.bf16.msra.mxu0 %v144
    %178 = vmatprep.subr.bf16.mxu0 %v147
    %179 = vmatpush1.bf16.msra.mxu0 %v146
    %180 = vmatprep.subr.bf16.mxu0 %v149
    %181 = vmatpush1.bf16.msra.mxu0 %v148
    %182 = vmatprep.subr.bf16.mxu0 %v151
    %183 = vmatpush1.bf16.msra.mxu0 %v150
    %184 = vmatprep.subr.bf16.mxu0 %v153
    %185 = vmatpush1.bf16.msra.mxu0 %v152
    %186 = vmatprep.subr.bf16.mxu0 %v155
    %187 = vmatpush1.bf16.msra.mxu0 %v154
    %188 = vmatprep.subr.bf16.mxu0 %v157
    %189 = vmatpush1.bf16.msra.mxu0 %v156
    %190 = vmatprep.subr.bf16.mxu0 0
    %191 = vmatpush1.bf16.msra.mxu0 0
    %192 = vmatprep.subr.bf16.mxu0 0
    %193 = vmatpush1.bf16.msra.mxu0 0
    %194 = vmatprep.subr.bf16.mxu0 0
    %195 = vmatpush1.bf16.msra.mxu0 0
    %196 = vmatprep.subr.bf16.mxu0 0
    %197 = vmatpush1.bf16.msra.mxu0 0
    %198 = vmatprep.subr.bf16.mxu0 0
    %199 = vmatpush1.bf16.msra.mxu0 0
    %200 = vmatprep.subr.bf16.mxu0 0
    %201 = vmatpush1.bf16.msra.mxu0 0
    %202 = vmatprep.subr.bf16.mxu0 0
    %203 = vmatpush1.bf16.msra.mxu0 0
    %204 = vmatprep.subr.bf16.mxu0 0
    %205 = vmatpush1.bf16.msra.mxu0 0
    %206 = vmatprep.mubr.bf16.mxu0 0
    %207 = vmatmul.mubr.bf16.gmra.mrb[0].mxu0 %v65
    %v208 = vpop.f32.mrb[0].mxu0
    %v209 = vadd.f32 %v87, %v208
    %v210 = vpop.f32.mrb[0].mxu0
    %v211 = vadd.f32 %v91, %v210
    %v212 = vpop.f32.mrb[0].mxu0
    %v213 = vadd.f32 %v87, %v212
    %v214 = vpop.f32.mrb[0].mxu0
    %v215 = vadd.f32 %v91, %v214
    %216 = vdwg.mxu0
    %v217 = vmax.f32 %v209, 0.0
    %v218 = vmax.f32 %v211, 0.0
    %v219 = vmax.f32 %v213, 0.0
    %v220 = vmax.f32 %v215, 0.0
    %v221 = vpack.c.bf16 %v219, %v217
    %v222 = vpack.c.bf16 %v220, %v218
    %v223 = vld [vmem:[#allocation7] sm:$0xf]
    %v224 = vld [vmem:[#allocation7 + $0x4] sm:$0xf]
    %v225 = vld [vmem:[#allocation7 + $0x8] sm:$0xf]
    %v226 = vld [vmem:[#allocation7 + $0xc] sm:$0xf]
    %v227 = vld [vmem:[#allocation7 + $0x10] sm:$0xf]
    %v228 = vld [vmem:[#allocation7 + $0x14] sm:$0xf]
    %v229 = vld [vmem:[#allocation7 + $0x18] sm:$0xf]
    %v230 = vld [vmem:[#allocation7 + $0x1c] sm:$0xf]
    %v231 = vld [vmem:[#allocation7 + $0x20] sm:$0xf]
    %v232 = vld [vmem:[#allocation7 + $0x24] sm:$0xf]
    %v233 = vld [vmem:[#allocation7 + $0x28] sm:$0xf]
    %v234 = vld [vmem:[#allocation7 + $0x2c] sm:$0xf]
    %v235 = vld [vmem:[#allocation7 + $0x30] sm:$0xf]
    %v236 = vld [vmem:[#allocation7 + $0x34] sm:$0xf]
    %v237 = vld [vmem:[#allocation7 + $0x38] sm:$0xf]
    %v238 = vld [vmem:[#allocation7 + $0x3c] sm:$0xf]
    %v239 = vld [vmem:[#allocation7 + $0x40] sm:$0xf]
    %v240 = vld [vmem:[#allocation7 + $0x44] sm:$0xf]
    %v241 = vld [vmem:[#allocation7 + $0x48] sm:$0xf]
    %v242 = vld [vmem:[#allocation7 + $0x4c] sm:$0xf]
    %v243 = vld [vmem:[#allocation7 + $0x50] sm:$0xf]
    %v244 = vld [vmem:[#allocation7 + $0x54] sm:$0xf]
    %v245 = vld [vmem:[#allocation7 + $0x58] sm:$0xf]
    %v246 = vld [vmem:[#allocation7 + $0x5c] sm:$0xf]
    %v247 = vld [vmem:[#allocation7 + $0x60] sm:$0xf]
    %v248 = vld [vmem:[#allocation7 + $0x64] sm:$0xf]
    %v249 = vld [vmem:[#allocation7 + $0x68] sm:$0xf]
    %v250 = vld [vmem:[#allocation7 + $0x6c] sm:$0xf]
    %v251 = vld [vmem:[#allocation7 + $0x70] sm:$0xf]
    %v252 = vld [vmem:[#allocation7 + $0x74] sm:$0xf]
    %v253 = vld [vmem:[#allocation7 + $0x78] sm:$0xf]
    %v254 = vld [vmem:[#allocation7 + $0x7c] sm:$0xf]
    %v255 = vld [vmem:[%s4] sm:$0x1]
    %v257 = vlaneseq
    %v258 = vshrl.u32 %v257, 7
    %v259 = vsub.s32 0, %v258
    %v260 = vrot.slane %v255, %v259
    %v294 = vunpack.c.l.b16 %v223
    %v295 = vunpack.c.l.b16 %v224
    %v296 = vunpack.c.l.b16 %v225
    %v297 = vunpack.c.l.b16 %v226
    %v298 = vunpack.c.l.b16 %v227
    %v299 = vunpack.c.l.b16 %v228
    %v300 = vunpack.c.l.b16 %v229
    %v301 = vunpack.c.l.b16 %v230
    %v302 = vunpack.c.l.b16 %v231
    %v303 = vunpack.c.l.b16 %v232
    %v304 = vunpack.c.l.b16 %v233
    %v305 = vunpack.c.l.b16 %v234
    %v306 = vunpack.c.l.b16 %v235
    %v307 = vunpack.c.l.b16 %v236
    %v308 = vunpack.c.l.b16 %v237
    %v309 = vunpack.c.l.b16 %v238
    %v310 = vunpack.c.l.b16 %v239
    %v311 = vunpack.c.l.b16 %v240
    %v312 = vunpack.c.l.b16 %v241
    %v313 = vunpack.c.l.b16 %v242
    %v314 = vunpack.c.l.b16 %v243
    %v315 = vunpack.c.l.b16 %v244
    %v316 = vunpack.c.l.b16 %v245
    %v317 = vunpack.c.l.b16 %v246
    %v318 = vunpack.c.l.b16 %v247
    %v319 = vunpack.c.l.b16 %v248
    %v320 = vunpack.c.l.b16 %v249
    %v321 = vunpack.c.l.b16 %v250
    %v322 = vunpack.c.l.b16 %v251
    %v323 = vunpack.c.l.b16 %v252
    %v324 = vunpack.c.l.b16 %v253
    %v325 = vunpack.c.l.b16 %v254
    %v326 = vpack.c.b16 %v295, %v294
    %v327 = vpack.c.b16 %v297, %v296
    %v328 = vpack.c.b16 %v299, %v298
    %v329 = vpack.c.b16 %v301, %v300
    %v330 = vpack.c.b16 %v303, %v302
    %v331 = vpack.c.b16 %v305, %v304
    %v332 = vpack.c.b16 %v307, %v306
    %v333 = vpack.c.b16 %v309, %v308
    %v334 = vpack.c.b16 %v311, %v310
    %v335 = vpack.c.b16 %v313, %v312
    %v336 = vpack.c.b16 %v315, %v314
    %v337 = vpack.c.b16 %v317, %v316
    %v338 = vpack.c.b16 %v319, %v318
    %v339 = vpack.c.b16 %v321, %v320
    %v340 = vpack.c.b16 %v323, %v322
    %v341 = vpack.c.b16 %v325, %v324
    %358 = vmatprep.subr.bf16.mxu0 0
    %359 = vmatpush1.bf16.msra.mxu0 %v326
    %360 = vmatprep.subr.bf16.mxu0 0
    %361 = vmatpush1.bf16.msra.mxu0 %v327
    %362 = vmatprep.subr.bf16.mxu0 0
    %363 = vmatpush1.bf16.msra.mxu0 %v328
    %364 = vmatprep.subr.bf16.mxu0 0
    %365 = vmatpush1.bf16.msra.mxu0 %v329
    %366 = vmatprep.subr.bf16.mxu0 0
    %367 = vmatpush1.bf16.msra.mxu0 %v330
    %368 = vmatprep.subr.bf16.mxu0 0
    %369 = vmatpush1.bf16.msra.mxu0 %v331
    %370 = vmatprep.subr.bf16.mxu0 0
    %371 = vmatpush1.bf16.msra.mxu0 %v332
    %372 = vmatprep.subr.bf16.mxu0 0
    %373 = vmatpush1.bf16.msra.mxu0 %v333
    %374 = vmatprep.subr.bf16.mxu0 0
    %375 = vmatpush1.bf16.msra.mxu0 %v334
    %376 = vmatprep.subr.bf16.mxu0 0
    %377 = vmatpush1.bf16.msra.mxu0 %v335
    %378 = vmatprep.subr.bf16.mxu0 0
    %379 = vmatpush1.bf16.msra.mxu0 %v336
    %380 = vmatprep.subr.bf16.mxu0 0
    %381 = vmatpush1.bf16.msra.mxu0 %v337
    %382 = vmatprep.subr.bf16.mxu0 0
    %383 = vmatpush1.bf16.msra.mxu0 %v338
    %384 = vmatprep.subr.bf16.mxu0 0
    %385 = vmatpush1.bf16.msra.mxu0 %v339
    %386 = vmatprep.subr.bf16.mxu0 0
    %387 = vmatpush1.bf16.msra.mxu0 %v340
    %388 = vmatprep.subr.bf16.mxu0 0
    %389 = vmatpush1.bf16.msra.mxu0 %v341
    %390 = vmatprep.mubr.bf16.mxu0 %v222
    %391 = vmatmul.mubr.bf16.gmra.mrb[0].mxu0 %v221
    %v392 = vpop.f32.mrb[0].mxu0
    %v393 = vadd.f32 %v260, %v392
    %v394 = vpop.f32.mrb[0].mxu0
    %v395 = vpop.f32.mrb[0].mxu0
    %v396 = vadd.f32 %v260, %v395
    %v397 = vpop.f32.mrb[0].mxu0
    %398 = vdwg.mxu0
    %399 = vst [vmem:[#allocation8] sm:$0xff] %v393
    %400 = vst [vmem:[#allocation8 + $0x8] sm:$0xff] %v396
    // Predicated region
    $region34: #{tpu_custom_call.1} parent=1 // pred_check
      _
    $region35: #{tpu_custom_call.1} parent=1 // pred_check_branch
      %402 = sbr.rel (0) target = $region37
    $region36: #{tpu_custom_call.1} parent=1 // pred_region
      %s404 = ssub.s32 256, 256
      %405 = vsyncadd [#allocation4], %s404
      %s406 = sshll.u32 [#allocation8], 4
      %s407 = int_to_ptr.vmem [resolvable:$true] %s406
      %412 = dma.vmem_to_hbm [thread:$0]  %s407, 256, %s5, [#allocation4], 128, 128, 8
    $region37: #{tpu_custom_call.1} parent=1 // pred_fallthru
      _
    // Predicated region
    $region38: #{tpu_custom_call.1} parent=1 // pred_check
      _
    $region39: #{tpu_custom_call.1} parent=1 // pred_check_branch
      %414 = sbr.rel (0) target = $region41
    $region40: #{tpu_custom_call.1} parent=1 // pred_region
      %415 = dma.done [#allocation4], 256
    $region41: #{tpu_custom_call.1} parent=1 // pred_fallthru
      _
    %416 = vsyncpa [#allocation3], 1
    %417 = vsyncpa [#allocation6], 1
    %418 = vsyncpa [#allocation4], 1

// kernel: tpu_custom_call.1
$region0: #{tpu_custom_call.1}
  #allocation0 [shape = 'u32[]', space=smem, size = 0x4, offset = 0x4, fixed_abs, tag = 'smem constant byte address 0x4 - core index']
  #allocation1 [shape = 'u32[144,128]{1,0:T(1,128)}', space=vmem, size = 0x12000, scoped, tag = 'internal scratch']
  #allocation2 [shape = 'f32[16,128]{1,0:T(8,128)}', space=vmem, size = 0x2000, scoped, tag = 'scratch operand']
  %s0 = inlined_call_operand.hbm [shape: f32[16,128], index: 0, kind: input, shape index: {}]
  %s1 = inlined_call_operand.hbm [shape: bf16[128,256], index: 1, kind: input, shape index: {}]
  %s2 = inlined_call_operand.vmem [shape: f32[1,256], index: 2, kind: input, shape index: {}]
  %s3 = inlined_call_operand.hbm [shape: bf16[256,128], index: 3, kind: input, shape index: {}]
  %s4 = inlined_call_operand.vmem [shape: f32[1,128], index: 4, kind: input, shape index: {}]
  %s5 = inlined_call_operand.hbm [shape: f32[16,128], index: 5, kind: output, shape index: {}]
  %s6 = sld [smem:[#allocation0]]
  $region50: #{tpu_custom_call.1} parent=0
    _
  %s8 = ssub.s32 1, %s6
  %s9 = scalar_select 0, %s8, %s6
  $region1: #{tpu_custom_call.1} parent=0
    #allocation3 [shape = 'u8[8192]{0}', space=vmem, size = 0x2000, scoped, tag = 'input window, operand 0, single buffered']
    #allocation4 [shape = 's32[1]{0}', space=sflag, size = 0x4, scoped, tag = 'scoped memory for tpu_custom_call.1']
    #allocation5 [shape = 's32[1]{0}', space=sflag, size = 0x4, scoped, tag = 'scoped memory for tpu_custom_call.1']
    #allocation6 [shape = 'u8[65536]{0}', space=vmem, size = 0x10000, scoped, tag = 'input window, operand 1, single buffered']
    #allocation7 [shape = 's32[1]{0}', space=sflag, size = 0x4, scoped, tag = 'scoped memory for tpu_custom_call.1']
    #allocation8 [shape = 'u8[65536]{0}', space=vmem, size = 0x10000, scoped, tag = 'input window, operand 3, single buffered']
    #allocation9 [shape = 'u8[8192]{0}', space=vmem, size = 0x2000, scoped, tag = 'output window, operand 0, single buffered']
    %10 = vsyncpa [#allocation4], 0
    %11 = vsyncpa [#allocation7], 0
    %12 = vsyncpa [#allocation5], 0
    // Predicated region
    $region2: #{tpu_custom_call.1} parent=1 // pred_check
      _
    $region3: #{tpu_custom_call.1} parent=1 // pred_check_branch
      %14 = sbr.rel (0) target = $region5
    $region4: #{tpu_custom_call.1} parent=1 // pred_region
      %s16 = ssub.s32 256, 256
      %17 = vsyncadd [#allocation4], %s16
      %s18 = sshll.u32 [#allocation3], 4
      %s19 = int_to_ptr.vmem [resolvable:$true] %s18
      %24 = dma.hbm_to_vmem [thread:$0]  %s0, 256, %s19, [#allocation4], 128, 128, 8
    $region5: #{tpu_custom_call.1} parent=1 // pred_fallthru
      _
    // Predicated region
    $region6: #{tpu_custom_call.1} parent=1 // pred_check
      _
    $region7: #{tpu_custom_call.1} parent=1 // pred_check_branch
      %26 = sbr.rel (0) target = $region9
    $region8: #{tpu_custom_call.1} parent=1 // pred_region
      %s28 = ssub.s32 2048, 2048
      %29 = vsyncadd [#allocation7], %s28
      %s30 = sshll.u32 [#allocation6], 4
      %s31 = int_to_ptr.vmem [resolvable:$true] %s30
      %36 = dma.hbm_to_vmem [thread:$0]  %s1, 2048, %s31, [#allocation7], 128, 128, 8
    $region9: #{tpu_custom_call.1} parent=1 // pred_fallthru
      _
    // Predicated region
    $region10: #{tpu_custom_call.1} parent=1 // pred_check
      _
    $region11: #{tpu_custom_call.1} parent=1 // pred_check_branch
      %38 = sbr.rel (0) target = $region13
    $region12: #{tpu_custom_call.1} parent=1 // pred_region
      _
    $region13: #{tpu_custom_call.1} parent=1 // pred_fallthru
      _
    // Predicated region
    $region14: #{tpu_custom_call.1} parent=1 // pred_check
      _
    $region15: #{tpu_custom_call.1} parent=1 // pred_check_branch
      %40 = sbr.rel (0) target = $region17
    $region16: #{tpu_custom_call.1} parent=1 // pred_region
      %s42 = ssub.s32 2048, 2048
      %43 = vsyncadd [#allocation7], %s42
      %s44 = sshll.u32 [#allocation8], 4
      %s45 = int_to_ptr.vmem [resolvable:$true] %s44
      %50 = dma.hbm_to_vmem [thread:$0]  %s3, 2048, %s45, [#allocation7], 64, 64, 4
    $region17: #{tpu_custom_call.1} parent=1 // pred_fallthru
      _
    // Predicated region
    $region18: #{tpu_custom_call.1} parent=1 // pred_check
      _
    $region19: #{tpu_custom_call.1} parent=1 // pred_check_branch
      %52 = sbr.rel (0) target = $region21
    $region20: #{tpu_custom_call.1} parent=1 // pred_region
      _
    $region21: #{tpu_custom_call.1} parent=1 // pred_fallthru
      _
    // Predicated region
    $region22: #{tpu_custom_call.1} parent=1 // pred_check
      _
    $region23: #{tpu_custom_call.1} parent=1 // pred_check_branch
      %54 = sbr.rel (0) target = $region25
    $region24: #{tpu_custom_call.1} parent=1 // pred_region
      %55 = dma.done [#allocation4], 256
    $region25: #{tpu_custom_call.1} parent=1 // pred_fallthru
      _
    // Predicated region
    $region26: #{tpu_custom_call.1} parent=1 // pred_check
      _
    $region27: #{tpu_custom_call.1} parent=1 // pred_check_branch
      %57 = sbr.rel (0) target = $region29
    $region28: #{tpu_custom_call.1} parent=1 // pred_region
      %58 = dma.done [#allocation7], 2048
    $region29: #{tpu_custom_call.1} parent=1 // pred_fallthru
      _
    // Predicated region
    $region30: #{tpu_custom_call.1} parent=1 // pred_check
      _
    $region31: #{tpu_custom_call.1} parent=1 // pred_check_branch
      %60 = sbr.rel (0) target = $region33
    $region32: #{tpu_custom_call.1} parent=1 // pred_region
      %61 = dma.done [#allocation7], 2048
    $region33: #{tpu_custom_call.1} parent=1 // pred_fallthru
      _
    %p63 = scmp.eq.s32.totalorder 0, 0
    // Predicated region
    $region34: #{tpu_custom_call.1} parent=1 // pred_check
      %p64 = pneg %p63
    $region35: #{tpu_custom_call.1} parent=1 // pred_check_branch
      %66 = sbr.rel (%p64) target = $region37
    $region36: #{tpu_custom_call.1} parent=1 // pred_region
      %67 = vst [vmem:[#allocation2] sm:$0xff] 0.0
      %68 = vst [vmem:[#allocation2 + $0x8] sm:$0xff] 0.0
    $region37: #{tpu_custom_call.1} parent=1 // pred_fallthru
      _
    %v69 = vld [vmem:[#allocation3] sm:$0xff]
    %v70 = vld [vmem:[#allocation3 + $0x8] sm:$0xff]
    %v71 = vpack.c.bf16 %v70, %v69
    %v72 = vld [vmem:[#allocation6] sm:$0xff]
    %v73 = vld [vmem:[#allocation6 + $0x8] sm:$0xff]
    %v74 = vld [vmem:[#allocation6 + $0x10] sm:$0xff]
    %v75 = vld [vmem:[#allocation6 + $0x18] sm:$0xff]
    %v76 = vld [vmem:[#allocation6 + $0x20] sm:$0xff]
    %v77 = vld [vmem:[#allocation6 + $0x28] sm:$0xff]
    %v78 = vld [vmem:[#allocation6 + $0x30] sm:$0xff]
    %v79 = vld [vmem:[#allocation6 + $0x38] sm:$0xff]
    %v80 = vld [vmem:[#allocation6 + $0x40] sm:$0xff]
    %v81 = vld [vmem:[#allocation6 + $0x48] sm:$0xff]
    %v82 = vld [vmem:[#allocation6 + $0x50] sm:$0xff]
    %v83 = vld [vmem:[#allocation6 + $0x58] sm:$0xff]
    %v84 = vld [vmem:[#allocation6 + $0x60] sm:$0xff]
    %v85 = vld [vmem:[#allocation6 + $0x68] sm:$0xff]
    %v86 = vld [vmem:[#allocation6 + $0x70] sm:$0xff]
    %v87 = vld [vmem:[#allocation6 + $0x78] sm:$0xff]
    %v88 = vld [vmem:[%s2] sm:$0x3]
    %v90 = vlaneseq
    %v91 = vshrl.u32 %v90, 7
    %v92 = vsub.s32 0, %v91
    %v93 = vrot.slane %v88, %v92
    %v94 = vlaneseq
    %v95 = vshrl.u32 %v94, 7
    %v96 = vsub.s32 1, %v95
    %v97 = vrot.slane %v88, %v96
    %v116 = vunpack.c.l.b16 %v72
    %v117 = vunpack.c.h.b16 %v72
    %v118 = vunpack.c.l.b16 %v73
    %v119 = vunpack.c.h.b16 %v73
    %v120 = vunpack.c.l.b16 %v74
    %v121 = vunpack.c.h.b16 %v74
    %v122 = vunpack.c.l.b16 %v75
    %v123 = vunpack.c.h.b16 %v75
    %v124 = vunpack.c.l.b16 %v76
    %v125 = vunpack.c.h.b16 %v76
    %v126 = vunpack.c.l.b16 %v77
    %v127 = vunpack.c.h.b16 %v77
    %v128 = vunpack.c.l.b16 %v78
    %v129 = vunpack.c.h.b16 %v78
    %v130 = vunpack.c.l.b16 %v79
    %v131 = vunpack.c.h.b16 %v79
    %v132 = vunpack.c.l.b16 %v80
    %v133 = vunpack.c.h.b16 %v80
    %v134 = vunpack.c.l.b16 %v81
    %v135 = vunpack.c.h.b16 %v81
    %v136 = vunpack.c.l.b16 %v82
    %v137 = vunpack.c.h.b16 %v82
    %v138 = vunpack.c.l.b16 %v83
    %v139 = vunpack.c.h.b16 %v83
    %v140 = vunpack.c.l.b16 %v84
    %v141 = vunpack.c.h.b16 %v84
    %v142 = vunpack.c.l.b16 %v85
    %v143 = vunpack.c.h.b16 %v85
    %v144 = vunpack.c.l.b16 %v86
    %v145 = vunpack.c.h.b16 %v86
    %v146 = vunpack.c.l.b16 %v87
    %v147 = vunpack.c.h.b16 %v87
    %v148 = vpack.c.b16 %v118, %v116
    %v149 = vpack.c.b16 %v119, %v117
    %v150 = vpack.c.b16 %v122, %v120
    %v151 = vpack.c.b16 %v123, %v121
    %v152 = vpack.c.b16 %v126, %v124
    %v153 = vpack.c.b16 %v127, %v125
    %v154 = vpack.c.b16 %v130, %v128
    %v155 = vpack.c.b16 %v131, %v129
    %v156 = vpack.c.b16 %v134, %v132
    %v157 = vpack.c.b16 %v135, %v133
    %v158 = vpack.c.b16 %v138, %v136
    %v159 = vpack.c.b16 %v139, %v137
    %v160 = vpack.c.b16 %v142, %v140
    %v161 = vpack.c.b16 %v143, %v141
    %v162 = vpack.c.b16 %v146, %v144
    %v163 = vpack.c.b16 %v147, %v145
    %180 = vmatprep.subr.bf16.mxu0 %v149
    %181 = vmatpush1.bf16.msra.mxu0 %v148
    %182 = vmatprep.subr.bf16.mxu0 %v151
    %183 = vmatpush1.bf16.msra.mxu0 %v150
    %184 = vmatprep.subr.bf16.mxu0 %v153
    %185 = vmatpush1.bf16.msra.mxu0 %v152
    %186 = vmatprep.subr.bf16.mxu0 %v155
    %187 = vmatpush1.bf16.msra.mxu0 %v154
    %188 = vmatprep.subr.bf16.mxu0 %v157
    %189 = vmatpush1.bf16.msra.mxu0 %v156
    %190 = vmatprep.subr.bf16.mxu0 %v159
    %191 = vmatpush1.bf16.msra.mxu0 %v158
    %192 = vmatprep.subr.bf16.mxu0 %v161
    %193 = vmatpush1.bf16.msra.mxu0 %v160
    %194 = vmatprep.subr.bf16.mxu0 %v163
    %195 = vmatpush1.bf16.msra.mxu0 %v162
    %196 = vmatprep.subr.bf16.mxu0 0
    %197 = vmatpush1.bf16.msra.mxu0 0
    %198 = vmatprep.subr.bf16.mxu0 0
    %199 = vmatpush1.bf16.msra.mxu0 0
    %200 = vmatprep.subr.bf16.mxu0 0
    %201 = vmatpush1.bf16.msra.mxu0 0
    %202 = vmatprep.subr.bf16.mxu0 0
    %203 = vmatpush1.bf16.msra.mxu0 0
    %204 = vmatprep.subr.bf16.mxu0 0
    %205 = vmatpush1.bf16.msra.mxu0 0
    %206 = vmatprep.subr.bf16.mxu0 0
    %207 = vmatpush1.bf16.msra.mxu0 0
    %208 = vmatprep.subr.bf16.mxu0 0
    %209 = vmatpush1.bf16.msra.mxu0 0
    %210 = vmatprep.subr.bf16.mxu0 0
    %211 = vmatpush1.bf16.msra.mxu0 0
    %212 = vmatprep.mubr.bf16.mxu0 0
    %213 = vmatmul.mubr.bf16.gmra.mrb[0].mxu0 %v71
    %v214 = vpop.f32.mrb[0].mxu0
    %v215 = vadd.f32 %v93, %v214
    %v216 = vpop.f32.mrb[0].mxu0
    %v217 = vadd.f32 %v97, %v216
    %v218 = vpop.f32.mrb[0].mxu0
    %v219 = vadd.f32 %v93, %v218
    %v220 = vpop.f32.mrb[0].mxu0
    %v221 = vadd.f32 %v97, %v220
    %222 = vdwg.mxu0
    %v223 = vmax.f32 %v215, 0.0
    %v224 = vmax.f32 %v217, 0.0
    %v225 = vmax.f32 %v219, 0.0
    %v226 = vmax.f32 %v221, 0.0
    %v227 = vld [vmem:[#allocation2] sm:$0xff]
    %v228 = vld [vmem:[#allocation2 + $0x8] sm:$0xff]
    %v229 = vpack.c.bf16 %v225, %v223
    %v230 = vpack.c.bf16 %v226, %v224
    %v231 = vld [vmem:[#allocation8] sm:$0xf]
    %v232 = vld [vmem:[#allocation8 + $0x4] sm:$0xf]
    %v233 = vld [vmem:[#allocation8 + $0x8] sm:$0xf]
    %v234 = vld [vmem:[#allocation8 + $0xc] sm:$0xf]
    %v235 = vld [vmem:[#allocation8 + $0x10] sm:$0xf]
    %v236 = vld [vmem:[#allocation8 + $0x14] sm:$0xf]
    %v237 = vld [vmem:[#allocation8 + $0x18] sm:$0xf]
    %v238 = vld [vmem:[#allocation8 + $0x1c] sm:$0xf]
    %v239 = vld [vmem:[#allocation8 + $0x20] sm:$0xf]
    %v240 = vld [vmem:[#allocation8 + $0x24] sm:$0xf]
    %v241 = vld [vmem:[#allocation8 + $0x28] sm:$0xf]
    %v242 = vld [vmem:[#allocation8 + $0x2c] sm:$0xf]
    %v243 = vld [vmem:[#allocation8 + $0x30] sm:$0xf]
    %v244 = vld [vmem:[#allocation8 + $0x34] sm:$0xf]
    %v245 = vld [vmem:[#allocation8 + $0x38] sm:$0xf]
    %v246 = vld [vmem:[#allocation8 + $0x3c] sm:$0xf]
    %v247 = vld [vmem:[#allocation8 + $0x40] sm:$0xf]
    %v248 = vld [vmem:[#allocation8 + $0x44] sm:$0xf]
    %v249 = vld [vmem:[#allocation8 + $0x48] sm:$0xf]
    %v250 = vld [vmem:[#allocation8 + $0x4c] sm:$0xf]
    %v251 = vld [vmem:[#allocation8 + $0x50] sm:$0xf]
    %v252 = vld [vmem:[#allocation8 + $0x54] sm:$0xf]
    %v253 = vld [vmem:[#allocation8 + $0x58] sm:$0xf]
    %v254 = vld [vmem:[#allocation8 + $0x5c] sm:$0xf]
    %v255 = vld [vmem:[#allocation8 + $0x60] sm:$0xf]
    %v256 = vld [vmem:[#allocation8 + $0x64] sm:$0xf]
    %v257 = vld [vmem:[#allocation8 + $0x68] sm:$0xf]
    %v258 = vld [vmem:[#allocation8 + $0x6c] sm:$0xf]
    %v259 = vld [vmem:[#allocation8 + $0x70] sm:$0xf]
    %v260 = vld [vmem:[#allocation8 + $0x74] sm:$0xf]
    %v261 = vld [vmem:[#allocation8 + $0x78] sm:$0xf]
    %v262 = vld [vmem:[#allocation8 + $0x7c] sm:$0xf]
    %v295 = vunpack.c.l.b16 %v231
    %v296 = vunpack.c.l.b16 %v232
    %v297 = vunpack.c.l.b16 %v233
    %v298 = vunpack.c.l.b16 %v234
    %v299 = vunpack.c.l.b16 %v235
    %v300 = vunpack.c.l.b16 %v236
    %v301 = vunpack.c.l.b16 %v237
    %v302 = vunpack.c.l.b16 %v238
    %v303 = vunpack.c.l.b16 %v239
    %v304 = vunpack.c.l.b16 %v240
    %v305 = vunpack.c.l.b16 %v241
    %v306 = vunpack.c.l.b16 %v242
    %v307 = vunpack.c.l.b16 %v243
    %v308 = vunpack.c.l.b16 %v244
    %v309 = vunpack.c.l.b16 %v245
    %v310 = vunpack.c.l.b16 %v246
    %v311 = vunpack.c.l.b16 %v247
    %v312 = vunpack.c.l.b16 %v248
    %v313 = vunpack.c.l.b16 %v249
    %v314 = vunpack.c.l.b16 %v250
    %v315 = vunpack.c.l.b16 %v251
    %v316 = vunpack.c.l.b16 %v252
    %v317 = vunpack.c.l.b16 %v253
    %v318 = vunpack.c.l.b16 %v254
    %v319 = vunpack.c.l.b16 %v255
    %v320 = vunpack.c.l.b16 %v256
    %v321 = vunpack.c.l.b16 %v257
    %v322 = vunpack.c.l.b16 %v258
    %v323 = vunpack.c.l.b16 %v259
    %v324 = vunpack.c.l.b16 %v260
    %v325 = vunpack.c.l.b16 %v261
    %v326 = vunpack.c.l.b16 %v262
    %v327 = vpack.c.b16 %v296, %v295
    %v328 = vpack.c.b16 %v298, %v297
    %v329 = vpack.c.b16 %v300, %v299
    %v330 = vpack.c.b16 %v302, %v301
    %v331 = vpack.c.b16 %v304, %v303
    %v332 = vpack.c.b16 %v306, %v305
    %v333 = vpack.c.b16 %v308, %v307
    %v334 = vpack.c.b16 %v310, %v309
    %v335 = vpack.c.b16 %v312, %v311
    %v336 = vpack.c.b16 %v314, %v313
    %v337 = vpack.c.b16 %v316, %v315
    %v338 = vpack.c.b16 %v318, %v317
    %v339 = vpack.c.b16 %v320, %v319
    %v340 = vpack.c.b16 %v322, %v321
    %v341 = vpack.c.b16 %v324, %v323
    %v342 = vpack.c.b16 %v326, %v325
    %359 = vmatprep.subr.bf16.mxu0 0
    %360 = vmatpush1.bf16.msra.mxu0 %v327
    %361 = vmatprep.subr.bf16.mxu0 0
    %362 = vmatpush1.bf16.msra.mxu0 %v328
    %363 = vmatprep.subr.bf16.mxu0 0
    %364 = vmatpush1.bf16.msra.mxu0 %v329
    %365 = vmatprep.subr.bf16.mxu0 0
    %366 = vmatpush1.bf16.msra.mxu0 %v330
    %367 = vmatprep.subr.bf16.mxu0 0
    %368 = vmatpush1.bf16.msra.mxu0 %v331
    %369 = vmatprep.subr.bf16.mxu0 0
    %370 = vmatpush1.bf16.msra.mxu0 %v332
    %371 = vmatprep.subr.bf16.mxu0 0
    %372 = vmatpush1.bf16.msra.mxu0 %v333
    %373 = vmatprep.subr.bf16.mxu0 0
    %374 = vmatpush1.bf16.msra.mxu0 %v334
    %375 = vmatprep.subr.bf16.mxu0 0
    %376 = vmatpush1.bf16.msra.mxu0 %v335
    %377 = vmatprep.subr.bf16.mxu0 0
    %378 = vmatpush1.bf16.msra.mxu0 %v336
    %379 = vmatprep.subr.bf16.mxu0 0
    %380 = vmatpush1.bf16.msra.mxu0 %v337
    %381 = vmatprep.subr.bf16.mxu0 0
    %382 = vmatpush1.bf16.msra.mxu0 %v338
    %383 = vmatprep.subr.bf16.mxu0 0
    %384 = vmatpush1.bf16.msra.mxu0 %v339
    %385 = vmatprep.subr.bf16.mxu0 0
    %386 = vmatpush1.bf16.msra.mxu0 %v340
    %387 = vmatprep.subr.bf16.mxu0 0
    %388 = vmatpush1.bf16.msra.mxu0 %v341
    %389 = vmatprep.subr.bf16.mxu0 0
    %390 = vmatpush1.bf16.msra.mxu0 %v342
    %391 = vmatprep.mubr.bf16.mxu0 %v230
    %392 = vmatmul.mubr.bf16.gmra.mrb[0].mxu0 %v229
    %v393 = vpop.f32.mrb[0].mxu0
    %v394 = vadd.f32 0.0, %v393
    %v395 = vpop.f32.mrb[0].mxu0
    %v396 = vpop.f32.mrb[0].mxu0
    %v397 = vadd.f32 0.0, %v396
    %v398 = vpop.f32.mrb[0].mxu0
    %399 = vdwg.mxu0
    %v400 = vadd.f32 %v227, %v394
    %v401 = vadd.f32 %v228, %v397
    %402 = vst [vmem:[#allocation2] sm:$0xff] %v400
    %403 = vst [vmem:[#allocation2 + $0x8] sm:$0xff] %v401
    // Predicated region
    $region38: #{tpu_custom_call.1} parent=1 // pred_check
      %p404 = pneg %p63
    $region39: #{tpu_custom_call.1} parent=1 // pred_check_branch
      %406 = sbr.rel (%p404) target = $region41
    $region40: #{tpu_custom_call.1} parent=1 // pred_region
      %v407 = vld [vmem:[#allocation2] sm:$0xff]
      %v408 = vld [vmem:[#allocation2 + $0x8] sm:$0xff]
      %v409 = vld [vmem:[%s4] sm:$0x1]
      %v411 = vlaneseq
      %v412 = vshrl.u32 %v411, 7
      %v413 = vsub.s32 0, %v412
      %v414 = vrot.slane %v409, %v413
      %v416 = vadd.f32 %v407, %v414
      %v417 = vadd.f32 %v408, %v414
      %418 = vst [vmem:[#allocation9] sm:$0xff] %v416
      %419 = vst [vmem:[#allocation9 + $0x8] sm:$0xff] %v417
    $region41: #{tpu_custom_call.1} parent=1 // pred_fallthru
      _
    // Predicated region
    $region42: #{tpu_custom_call.1} parent=1 // pred_check
      _
    $region43: #{tpu_custom_call.1} parent=1 // pred_check_branch
      %421 = sbr.rel (0) target = $region45
    $region44: #{tpu_custom_call.1} parent=1 // pred_region
      %s423 = ssub.s32 256, 256
      %424 = vsyncadd [#allocation5], %s423
      %s425 = sshll.u32 [#allocation9], 4
      %s426 = int_to_ptr.vmem [resolvable:$true] %s425
      %431 = dma.vmem_to_hbm [thread:$0]  %s426, 256, %s5, [#allocation5], 128, 128, 8
    $region45: #{tpu_custom_call.1} parent=1 // pred_fallthru
      _
    // Predicated region
    $region46: #{tpu_custom_call.1} parent=1 // pred_check
      _
    $region47: #{tpu_custom_call.1} parent=1 // pred_check_branch
      %433 = sbr.rel (0) target = $region49
    $region48: #{tpu_custom_call.1} parent=1 // pred_region
      %434 = dma.done [#allocation5], 256
    $region49: #{tpu_custom_call.1} parent=1 // pred_fallthru
      _
    %435 = vsyncpa [#allocation4], 1
    %436 = vsyncpa [#allocation7], 1
    %437 = vsyncpa [#allocation5], 1

</llo_original>
